<compile_context>
chip_gen: v5e
topology: v5e:2x2
jax: 0.10.0
libtpu: 0.0.40
codegen_flags: <defaults>
</compile_context>

<pallas_src>
import math
from functools import partial

import jax
import jax.numpy as jnp
from jax.experimental import pallas as pl
from jax.experimental.pallas import tpu as pltpu


def _round_up(x, m):
    return ((x + m - 1) // m) * m


def _subsidy_linear_kernel(x_ref, w_ref, b_ref, out_ref, stats_ref, *scratch,
                           subsidy, n_rows, n_cols, tm, tn,
                           mask_rows, mask_cols):
    """One (i, j, k) grid step of out = relu(x @ W_t + b + subsidy) + z stats."""
    # Hoisted grid queries: pl.program_id inside a pl.when branch does not lower
    # in interpret mode (and gains nothing on TPU).
    i = pl.program_id(0)
    j = pl.program_id(1)
    k = pl.program_id(2)
    k_last = pl.num_programs(2) - 1

    # f32 output: accumulate straight into the resident out block (its BlockSpec
    # index is constant over k).  bf16 output: accumulate in the f32 scratch.
    acc_ref = scratch[0] if scratch else out_ref

    @pl.when(k == 0)
    def _init():
        acc_ref[...] = jnp.zeros_like(acc_ref)

    # bf16 (or f32) operands, f32 accumulation on the MXU.
    acc_ref[...] += jnp.dot(x_ref[...], w_ref[...],
                            preferred_element_type=jnp.float32)

    @pl.when(k == k_last)
    def _finalize():
        z = acc_ref[...] + b_ref[...]                          # (tm, tn) f32

        # relu(z + subsidy); subsidy is a compile-time Python float.
        out_ref[...] = jnp.maximum(z + subsidy, 0.0).astype(out_ref.dtype)

        # Statistics partial sums over the valid region.  Masks are only built
        # when the problem is actually ragged along that axis.
        zm = z
        if mask_rows or mask_cols:
            valid = None
            if mask_rows:
                row = jax.lax.broadcasted_iota(jnp.int32, (tm, tn), 0) + i * tm
                valid = row < n_rows
            if mask_cols:
                col = jax.lax.broadcasted_iota(jnp.int32, (tm, tn), 1) + j * tn
                cval = col < n_cols
                valid = cval if valid is None else (valid & cval)
            zm = jnp.where(valid, z, 0.0)

        psum_z = jnp.sum(zm)             # single z pass, reused for msl and var
        psum_z2 = jnp.sum(zm * zm)

        # Per-(i,j) lane-dense (8,128) stats block: lane 0 holds sum(z),
        # lane 1 holds sum(z^2) (replicated over sublanes).
        lane = jax.lax.broadcasted_iota(jnp.int32, (8, 128), 1)
        stats_ref[...] = jnp.where(lane == 0, psum_z,
                                   jnp.where(lane == 1, psum_z2, 0.0))


def subsidy_linear_v2_forward(x, weight, bias, *, epsilon=0.05, gamma=1.0,
                              decay=1.0, tm=256, tn=256, tk=512,
                              use_bf16=True, out_dtype=jnp.float32):
    """Pallas forward of SubsidyLinearV2.

    Returns (relu(x @ W^T + b + subsidy), mean_squared_length, activation_variance).
    x: (B, IN); weight: (OUT, IN) (PyTorch convention); bias: (OUT,).
    """
    B, IN = x.shape
    OUT, IN_w = weight.shape
    assert IN_w == IN, "weight must be (out_features, in_features)"

    # Forward-only setting: weight.grad is None -> gradient_norm = 0.0.
    # TODO(synk): decay_scheduler.get_decay(step) and torch.norm(weight.grad) have
    # no forward-pass equivalent; decay defaults to 1.0 and gradient_norm to 0.0.
    gradient_norm = 0.0
    subsidy = float(gamma) * max(0.0, float(epsilon) - gradient_norm) * float(decay)

    op_dtype = jnp.bfloat16 if use_bf16 else jnp.float32
    out_dtype = jnp.dtype(out_dtype)
    acc_in_out = out_dtype == jnp.float32     # f32 out -> accumulate in out_ref

    # Effective tiles: clamp to the (8/128-rounded) problem size so small
    # problems don't allocate oversized blocks.  Defaults (256, 256, 512) feed
    # the 256-wide v6e/v7x MXU; everything stays a (8,128) multiple for v5e.
    tm = min(tm, _round_up(B, 8))
    tn = min(tn, _round_up(OUT, 128))
    tk = min(tk, _round_up(IN, 128))

    # Only K is padded (zeros required for a correct k-accumulation).  Ragged
    # M / N edge blocks are masked by Pallas on writeback and by the in-kernel
    # stats mask, so no M/N padding and no output slice.
    INp = _round_up(IN, tk)
    grid_m = pl.cdiv(B, tm)
    grid_n = pl.cdiv(OUT, tn)
    grid_k = INp // tk

    # Cast to the operand dtype *before* the transpose/pad (halves transpose
    # bytes).  NOTE: for a reused layer parameter, cache this (IN, OUT) weight
    # outside the per-call path so the kernel is weight-read-only.
    x_p = x.astype(op_dtype)
    w_t = weight.astype(op_dtype).T                           # (IN, OUT): MXU-ready
    if INp != IN:
        x_p = jnp.pad(x_p, ((0, 0), (0, INp - IN)))
        w_t = jnp.pad(w_t, ((0, INp - IN), (0, 0)))
    b_2d = bias.astype(jnp.float32).reshape(1, OUT)

    scratch_shapes = [] if acc_in_out else [pltpu.VMEM((tm, tn), jnp.float32)]

    kernel = partial(_subsidy_linear_kernel, subsidy=subsidy,
                     n_rows=B, n_cols=OUT, tm=tm, tn=tn,
                     mask_rows=(B % tm != 0), mask_cols=(OUT % tn != 0))

    op_bytes = jnp.dtype(op_dtype).itemsize
    out_bytes = out_dtype.itemsize
    # Double-buffered working set (+ accumulator); cap below v7x's 64 MiB/TC.
    working = 2 * (tm * tk * op_bytes + tk * tn * op_bytes
                   + tm * tn * out_bytes + 8 * 128 * 4)
    if not acc_in_out:
        working += tm * tn * 4
    vmem_limit = int(min(max(2 * working, 32 * 1024 * 1024), 48 * 1024 * 1024))

    cost = pl.CostEstimate(
        flops=2 * B * OUT * INp,
        transcendentals=0,
        bytes_accessed=(B * INp * op_bytes + INp * OUT * op_bytes
                        + B * OUT * out_bytes),
    )

    out, stats = pl.pallas_call(
        kernel,
        out_shape=(
            jax.ShapeDtypeStruct((B, OUT), out_dtype),
            jax.ShapeDtypeStruct((grid_m * 8, grid_n * 128), jnp.float32),
        ),
        grid_spec=pltpu.PrefetchScalarGridSpec(
            num_scalar_prefetch=0,
            grid=(grid_m, grid_n, grid_k),
            in_specs=[
                pl.BlockSpec((tm, tk), lambda i, j, k: (i, k)),   # x tile
                pl.BlockSpec((tk, tn), lambda i, j, k: (k, j)),   # W^T tile
                pl.BlockSpec((1, tn), lambda i, j, k: (0, j)),    # bias tile
            ],
            out_specs=(
                pl.BlockSpec((tm, tn), lambda i, j, k: (i, j)),   # relu output
                pl.BlockSpec((8, 128), lambda i, j, k: (i, j)),   # stats partials
            ),
            scratch_shapes=scratch_shapes,
        ),
        compiler_params=pltpu.CompilerParams(
            dimension_semantics=("parallel", "parallel", "arbitrary"),
            vmem_limit_bytes=vmem_limit,
        ),
        cost_estimate=cost,
    )(x_p, w_t, b_2d)

    # Tiny cross-tile scalar reduction (grid_m x grid_n partials each).
    sum_z = jnp.sum(stats[0::8, 0::128])
    sum_z2 = jnp.sum(stats[0::8, 1::128])
    n_elems = float(B * OUT)
    msl = sum_z2 / n_elems                       # == mean_b( sum_j z^2 / OUT )
    mean_z = sum_z / n_elems
    var = jnp.maximum(sum_z2 / n_elems - mean_z * mean_z, 0.0)  # clamp one-pass var
    return out, msl, var


def init_params(key, in_features, out_features):
    """Deterministic init matching the module: xavier_uniform weight,
    PyTorch-default uniform bias."""
    kw, kb = jax.random.split(key)
    bound_w = math.sqrt(6.0 / (in_features + out_features))       # glorot uniform
    weight = jax.random.uniform(
        kw, (out_features, in_features), jnp.float32, -bound_w, bound_w)
    bound_b = 1.0 / math.sqrt(in_features)                        # nn.Linear default
    bias = jax.random.uniform(kb, (out_features,), jnp.float32, -bound_b, bound_b)
    return weight, bias


if __name__ == "__main__":
    key = jax.random.PRNGKey(0)
    kx, kp = jax.random.split(key)

    # Small, deliberately non-aligned shapes: exercises ragged M/N blocks,
    # zero-padded K, and a multi-tile grid.
    B, IN, OUT = 200, 320, 192
    x = jax.random.normal(kx, (B, IN), jnp.float32)
    weight, bias = init_params(kp, IN, OUT)

    epsilon, gamma = 0.05, 1.0

    # Pure-JAX reference at the same (bf16 operands, f32 accumulate) precision.
    xb = x.astype(jnp.bfloat16).astype(jnp.float32)
    wb = weight.astype(jnp.bfloat16).astype(jnp.float32)
    z_ref = xb @ wb.T + bias
    msl_ref = jnp.mean(jnp.sum(z_ref ** 2, axis=1) / OUT)
    var_ref = jnp.var(z_ref)
    subsidy_ref = gamma * max(0.0, epsilon - 0.0) * 1.0
    out_ref = jnp.maximum(z_ref + subsidy_ref, 0.0)

    # 1) Small explicit tiles: ragged M/N + padded K on a 2x2x3 grid,
    #    f32 output (accumulate-directly-into-out_ref path).
    out1, msl1, var1 = subsidy_linear_v2_forward(
        x, weight, bias, epsilon=epsilon, gamma=gamma, decay=1.0,
        tm=128, tn=128, tk=128, out_dtype=jnp.float32)
    out1 = jax.block_until_ready(out1)
    assert out1.shape == (B, OUT) and out1.dtype == jnp.float32
    assert jnp.allclose(out1, out_ref, atol=2e-3, rtol=2e-3), "out mismatch (f32)"
    assert jnp.allclose(msl1, msl_ref, atol=2e-3, rtol=2e-3), "msl mismatch (f32)"
    assert jnp.allclose(var1, var_ref, atol=2e-3, rtol=2e-3), "var mismatch (f32)"

    # 2) Default big tiles (256/256/512, clamped to the problem size) with a
    #    bf16 output (f32 scratch-accumulator path, halves writeback on v5e).
    out2, msl2, var2 = subsidy_linear_v2_forward(
        x, weight, bias, epsilon=epsilon, gamma=gamma, decay=1.0,
        out_dtype=jnp.bfloat16)
    out2 = jax.block_until_ready(out2)
    assert out2.shape == (B, OUT) and out2.dtype == jnp.bfloat16
    assert jnp.allclose(out2.astype(jnp.float32), out_ref,
                        atol=5e-2, rtol=2e-2), "out mismatch (bf16)"
    assert jnp.allclose(msl2, msl_ref, atol=2e-3, rtol=2e-3), "msl mismatch (bf16)"
    assert jnp.allclose(var2, var_ref, atol=2e-3, rtol=2e-3), "var mismatch (bf16)"

    print("KERNEL_OK")
</pallas_src>

<mosaic_0001>
module attributes {stable_mosaic.version = 11 : i64} {
  func.func @_subsidy_linear_kernel(%arg0: i32, %arg1: i32, %arg2: i32, %arg3: memref<128x128xbf16, #tpu.memory_space<vmem>>, %arg4: memref<128x128xbf16, #tpu.memory_space<vmem>>, %arg5: memref<1x128xf32, #tpu.memory_space<vmem>>, %arg6: memref<128x128xf32, #tpu.memory_space<vmem>>, %arg7: memref<8x128xf32, #tpu.memory_space<vmem>>) attributes {dimension_semantics = [#tpu.dimension_semantics<parallel>, #tpu.dimension_semantics<parallel>, #tpu.dimension_semantics<arbitrary>], iteration_bounds = array<i64: 2, 2, 3>, scalar_prefetch = 0 : i64, scratch_operands = 0 : i64, tpu.core_type = #tpu.core_type<tc>, window_params = [{transform_indices = @transform_0, window_bounds = array<i64: 128, 128>}, {transform_indices = @transform_1, window_bounds = array<i64: 128, 128>}, {transform_indices = @transform_2, window_bounds = array<i64: 1, 128>}, {transform_indices = @transform_3, window_bounds = array<i64: 128, 128>}, {transform_indices = @transform_4, window_bounds = array<i64: 8, 128>}]} {
    %c0_i32 = arith.constant 0 : i32
    %0 = arith.cmpi eq, %arg2, %c0_i32 : i32
    %1 = arith.extui %0 : i1 to i32
    %c0_i32_0 = arith.constant 0 : i32
    %2 = arith.cmpi ne, %1, %c0_i32_0 : i32
    scf.if %2 {
      %cst_9 = arith.constant 0.000000e+00 : f32
      %12 = vector.broadcast %cst_9 : f32 to vector<128x128xf32>
      %c0_10 = arith.constant 0 : index
      %c0_11 = arith.constant 0 : index
      %13 = vector.load %arg6[%c0_10, %c0_11] : memref<128x128xf32, #tpu.memory_space<vmem>>, vector<128x128xf32>
      tpu.vector_store %arg6[%c0_10, %c0_11], %12 {strides = array<i32>} : memref<128x128xf32, #tpu.memory_space<vmem>>, vector<128x128xf32>,
    } else {
    }
    %c0 = arith.constant 0 : index
    %c0_1 = arith.constant 0 : index
    %3 = vector.load %arg6[%c0, %c0_1] : memref<128x128xf32, #tpu.memory_space<vmem>>, vector<128x128xf32>
    %c0_2 = arith.constant 0 : index
    %c0_3 = arith.constant 0 : index
    %4 = vector.load %arg3[%c0_2, %c0_3] : memref<128x128xbf16, #tpu.memory_space<vmem>>, vector<128x128xbf16>
    %c0_4 = arith.constant 0 : index
    %c0_5 = arith.constant 0 : index
    %5 = vector.load %arg4[%c0_4, %c0_5] : memref<128x128xbf16, #tpu.memory_space<vmem>>, vector<128x128xbf16>
    %cst = arith.constant dense<0.000000e+00> : vector<128x128xf32>
    %6 = tpu.matmul %4, %5, %cst {dimension_numbers = #tpu.dot_dimension_numbers<[1], [0], [0], [1], [0, 0, 1, 1], [], []>} : vector<128x128xbf16>, vector<128x128xbf16>, vector<128x128xf32> -> vector<128x128xf32>
    %7 = arith.addf %3, %6 : vector<128x128xf32>
    %c0_6 = arith.constant 0 : index
    %c0_7 = arith.constant 0 : index
    %8 = vector.load %arg6[%c0_6, %c0_7] : memref<128x128xf32, #tpu.memory_space<vmem>>, vector<128x128xf32>
    tpu.vector_store %arg6[%c0_6, %c0_7], %7 {strides = array<i32>} : memref<128x128xf32, #tpu.memory_space<vmem>>, vector<128x128xf32>,
    %c2_i32 = arith.constant 2 : i32
    %9 = arith.cmpi eq, %arg2, %c2_i32 : i32
    %10 = arith.extui %9 : i1 to i32
    %c0_i32_8 = arith.constant 0 : i32
    %11 = arith.cmpi ne, %10, %c0_i32_8 : i32
    scf.if %11 {
      %c0_9 = arith.constant 0 : index
      %c0_10 = arith.constant 0 : index
      %12 = vector.load %arg6[%c0_9, %c0_10] : memref<128x128xf32, #tpu.memory_space<vmem>>, vector<128x128xf32>
      %c0_11 = arith.constant 0 : index
      %c0_12 = arith.constant 0 : index
      %13 = vector.load %arg5[%c0_11, %c0_12] : memref<1x128xf32, #tpu.memory_space<vmem>>, vector<1x128xf32>
      %14 = vector.broadcast %13 : vector<1x128xf32> to vector<128x128xf32>
      %15 = arith.addf %12, %14 : vector<128x128xf32>
      %cst_13 = arith.constant 5.000000e-02 : f32
      %16 = vector.broadcast %cst_13 : f32 to vector<128x128xf32>
      %17 = arith.addf %15, %16 : vector<128x128xf32>
      %cst_14 = arith.constant 0.000000e+00 : f32
      %18 = vector.broadcast %cst_14 : f32 to vector<128x128xf32>
      %19 = arith.maximumf %17, %18 : vector<128x128xf32>
      %c0_15 = arith.constant 0 : index
      %c0_16 = arith.constant 0 : index
      %20 = vector.load %arg6[%c0_15, %c0_16] : memref<128x128xf32, #tpu.memory_space<vmem>>, vector<128x128xf32>
      tpu.vector_store %arg6[%c0_15, %c0_16], %19 {strides = array<i32>} : memref<128x128xf32, #tpu.memory_space<vmem>>, vector<128x128xf32>,
      %21 = tpu.iota {dimensions = array<i32: 0>} : vector<128x128xi32>
      %c128_i32 = arith.constant 128 : i32
      %22 = arith.muli %arg0, %c128_i32 : i32
      %23 = vector.broadcast %22 : i32 to vector<128x128xi32>
      %24 = arith.addi %21, %23 : vector<128x128xi32>
      %c200_i32 = arith.constant 200 : i32
      %25 = vector.broadcast %c200_i32 : i32 to vector<128x128xi32>
      %26 = arith.cmpi slt, %24, %25 : vector<128x128xi32>
      %27 = tpu.iota {dimensions = array<i32: 1>} : vector<128x128xi32>
      %c128_i32_17 = arith.constant 128 : i32
      %28 = arith.muli %arg1, %c128_i32_17 : i32
      %29 = vector.broadcast %28 : i32 to vector<128x128xi32>
      %30 = arith.addi %27, %29 : vector<128x128xi32>
      %c192_i32 = arith.constant 192 : i32
      %31 = vector.broadcast %c192_i32 : i32 to vector<128x128xi32>
      %32 = arith.cmpi slt, %30, %31 : vector<128x128xi32>
      %33 = arith.andi %26, %32 : vector<128x128xi1>
      %cst_18 = arith.constant 0.000000e+00 : f32
      %34 = vector.broadcast %cst_18 : f32 to vector<128x128xf32>
      %35 = arith.select %33, %15, %34 : vector<128x128xi1>, vector<128x128xf32>
      %36 = vector.shape_cast %35 : vector<128x128xf32> to vector<1x128x128xf32>
      %cst_19 = arith.constant dense<0.000000e+00> : vector<1xf32>
      %37 = vector.multi_reduction <add>, %36, %cst_19 [1, 2] : vector<1x128x128xf32> to vector<1xf32>
      %38 = vector.shape_cast %37 : vector<1xf32> to vector<1x1x1xf32>
      %39 = vector.extract %38[0, 0, 0] : f32 from vector<1x1x1xf32>
      %40 = arith.mulf %35, %35 : vector<128x128xf32>
      %41 = vector.shape_cast %40 : vector<128x128xf32> to vector<1x128x128xf32>
      %cst_20 = arith.constant dense<0.000000e+00> : vector<1xf32>
      %42 = vector.multi_reduction <add>, %41, %cst_20 [1, 2] : vector<1x128x128xf32> to vector<1xf32>
      %43 = vector.shape_cast %42 : vector<1xf32> to vector<1x1x1xf32>
      %44 = vector.extract %43[0, 0, 0] : f32 from vector<1x1x1xf32>
      %45 = tpu.iota {dimensions = array<i32: 1>} : vector<8x128xi32>
      %c0_i32_21 = arith.constant 0 : i32
      %46 = vector.broadcast %c0_i32_21 : i32 to vector<8x128xi32>
      %47 = arith.cmpi eq, %45, %46 : vector<8x128xi32>
      %c1_i32 = arith.constant 1 : i32
      %48 = vector.broadcast %c1_i32 : i32 to vector<8x128xi32>
      %49 = arith.cmpi eq, %45, %48 : vector<8x128xi32>
      %cst_22 = arith.constant 0.000000e+00 : f32
      %50 = vector.broadcast %44 : f32 to vector<8x128xf32>
      %51 = vector.broadcast %cst_22 : f32 to vector<8x128xf32>
      %52 = arith.select %49, %50, %51 : vector<8x128xi1>, vector<8x128xf32>
      %53 = vector.broadcast %39 : f32 to vector<8x128xf32>
      %54 = arith.select %47, %53, %52 : vector<8x128xi1>, vector<8x128xf32>
      %c0_23 = arith.constant 0 : index
      %c0_24 = arith.constant 0 : index
      %55 = vector.load %arg7[%c0_23, %c0_24] : memref<8x128xf32, #tpu.memory_space<vmem>>, vector<8x128xf32>
      tpu.vector_store %arg7[%c0_23, %c0_24], %54 {strides = array<i32>} : memref<8x128xf32, #tpu.memory_space<vmem>>, vector<8x128xf32>,
    } else {
    }
    return
  }
  func.func @transform_0(%arg0: i32, %arg1: i32, %arg2: i32) -> (i32, i32) {
    %c0_i32 = arith.constant 0 : i32
    return %arg0, %arg2 : i32, i32
  }
  func.func @transform_1(%arg0: i32, %arg1: i32, %arg2: i32) -> (i32, i32) {
    %c0_i32 = arith.constant 0 : i32
    return %arg2, %arg1 : i32, i32
  }
  func.func @transform_2(%arg0: i32, %arg1: i32, %arg2: i32) -> (i32, i32) {
    %c0_i32 = arith.constant 0 : i32
    %c0_i32_0 = arith.constant 0 : i32
    return %c0_i32, %arg1 : i32, i32
  }
  func.func @transform_3(%arg0: i32, %arg1: i32, %arg2: i32) -> (i32, i32) {
    %c0_i32 = arith.constant 0 : i32
    return %arg0, %arg1 : i32, i32
  }
  func.func @transform_4(%arg0: i32, %arg1: i32, %arg2: i32) -> (i32, i32) {
    %c0_i32 = arith.constant 0 : i32
    return %arg0, %arg1 : i32, i32
  }
}

</mosaic_0001>

<llo_original>
// kernel: tpu_custom_call.1
$region0: #{tpu_custom_call.1}
  #allocation0 [shape = 'u32[]', space=smem, size = 0x4, offset = 0x4, fixed_abs, tag = 'smem constant byte address 0x4 - core index']
  #allocation1 [shape = 'u32[72,128]{1,0:T(1,128)}', space=vmem, size = 0x9000, scoped, tag = 'internal scratch']
  %s0 = inlined_call_operand.vmem [shape: bf16[200,384], index: 0, kind: input, shape index: {}]
  %s1 = inlined_call_operand.vmem [shape: bf16[384,192], index: 1, kind: input, shape index: {}]
  %s2 = inlined_call_operand.vmem [shape: f32[1,192], index: 2, kind: input, shape index: {}]
  %s3 = inlined_call_operand.vmem [shape: f32[200,192], index: 3, kind: output, shape index: {0}]
  %s4 = inlined_call_operand.hbm [shape: f32[16,256], index: 4, kind: output, shape index: {1}]
  %5 = xla_tuple %s3, %s4
  %s6 = sld [smem:[#allocation0]]
  $region198: #{tpu_custom_call.1} parent=0
    _
  %s8 = ssub.s32 1, %s6
  %s9 = scalar_select 0, %s8, %s6
  $region1: #{tpu_custom_call.1} parent=0
    #allocation2 [shape = 'u8[65536]{0}', space=vmem, size = 0x10000, scoped, tag = 'input window, operand 0']
    #allocation3 [shape = 'u8[65536]{0}', space=vmem, size = 0x10000, scoped, tag = 'input window, operand 1']
    #allocation4 [shape = 'u8[131072]{0}', space=vmem, size = 0x20000, scoped, tag = 'output window, operand 0']
    #allocation5 [shape = 'u8[8192]{0}', space=vmem, size = 0x2000, scoped, tag = 'output window, operand 1']
    #allocation6 [shape = 's32[2]{0}', space=sflag, size = 0x8, scoped, tag = 'scoped memory for tpu_custom_call.1']
    %10 = vsyncpa [#allocation6], 0
    %s11 = scalar_lea.sflag [#allocation6], 1
    %12 = vsyncpa %s11, 0
    loop: start=0, step=1, limit=14
    $region2: #{tpu_custom_call.1} parent=1 // loop_pre_header
      _
    $region3: #{tpu_custom_call.1} parent=1 // loop_header
      %s14 = sphi 0, %s18
      %p15 = scmp.ge.s32.totalorder %s14, 14
      %s21 = sphi 0, %s40
      %s22 = sphi 0, %s36
      %s23 = sphi 0, %s32
      %s24 = sphi 0, %s21
      %s25 = sphi 0, %s22
      %s26 = sphi 0, %s23
      %s27 = sphi 0, %s24
      %s28 = sphi 0, %s25
      %s29 = sphi 0, %s26
      %s45 = sphi 0, %s47
      %s48 = sphi 0, %s45
      %s49 = sphi 0, %s48
      %s65 = sphi 0, %s49
      %s73 = sphi 0, %s75
      %s76 = sphi 0, %s73
      %s77 = sphi 0, %s76
      %s93 = sphi 0, %s77
      %s99 = sphi 0, %s101
      %s102 = sphi 0, %s99
      %s103 = sphi 0, %s102
      %s119 = sphi 0, %s103
      %s127 = sphi 0, %s129
      %s130 = sphi 0, %s127
      %s131 = sphi 0, %s130
      %s147 = sphi 0, %s131
      %s155 = sphi 0, %s157
      %s158 = sphi 0, %s155
      %s159 = sphi 0, %s158
      %s175 = sphi 0, %s159
    $region4: #{tpu_custom_call.1} parent=1 // loop_header_branch
      %17 = sbr.rel (%p15) target = $region8
    $region5: #{tpu_custom_call.1} parent=1 // loop_body
      %s19 = ssub.s32 %s14, 1
      %s20 = ssub.s32 %s14, 2
      %s30 = sadd.s32 1, %s23
      %p31 = scmp.ge.s32.totalorder %s30, 3
      %s32 = scalar_select %p31, 0, %s30
      %s33 = sadd.s32 1, %s22
      %s34 = scalar_select %p31, %s33, %s22
      %p35 = scmp.ge.s32.totalorder %s34, 2
      %s36 = scalar_select %p35, 0, %s34
      %s37 = sadd.s32 1, %s21
      %s38 = scalar_select %p35, %s37, %s21
      %p39 = scmp.ge.s32.totalorder %s38, 2
      %s40 = scalar_select %p39, 0, %s38
      %s41 = ssub.s32 %s21, %s40
      %s42 = ssub.s32 %s23, %s32
      %s43 = sor.u32 %s41, %s42
      %p44 = scmp.eq.s32.totalorder %s43, 0
      %s46 = sadd.s32 %s45, 1
      %s47 = scalar_select %p44, %s45, %s46
      %p50 = pneg %p44
      %p51 = scmp.eq.s32.totalorder %s14, 11
      %p52 = por %p50, %p51
      %p53 = scmp.ne.s32.totalorder %s45, %s48
      %p54 = scmp.eq.s32.totalorder %s14, 0
      %p55 = por %p53, %p54
      %p56 = scmp.ne.s32.totalorder %s45, %s48
      %p57 = scmp.eq.s32.totalorder %s19, 11
      %p58 = por %p56, %p57
      %p59 = scmp.ne.s32.totalorder %s48, %s49
      %p60 = scmp.eq.s32.totalorder %s19, 0
      %p61 = por %p59, %p60
      %p62 = scmp.ne.s32.totalorder %s48, %s49
      %p63 = scmp.eq.s32.totalorder %s20, 11
      %p64 = por %p62, %p63
      %p66 = scmp.ne.s32.totalorder %s49, %s65
      %p67 = scmp.eq.s32.totalorder %s20, 0
      %p68 = por %p66, %p67
      %s69 = ssub.s32 %s23, %s32
      %s70 = ssub.s32 %s22, %s36
      %s71 = sor.u32 %s69, %s70
      %p72 = scmp.eq.s32.totalorder %s71, 0
      %s74 = sadd.s32 %s73, 1
      %s75 = scalar_select %p72, %s73, %s74
      %p78 = pneg %p72
      %p79 = scmp.eq.s32.totalorder %s14, 11
      %p80 = por %p78, %p79
      %p81 = scmp.ne.s32.totalorder %s73, %s76
      %p82 = scmp.eq.s32.totalorder %s14, 0
      %p83 = por %p81, %p82
      %p84 = scmp.ne.s32.totalorder %s73, %s76
      %p85 = scmp.eq.s32.totalorder %s19, 11
      %p86 = por %p84, %p85
      %p87 = scmp.ne.s32.totalorder %s76, %s77
      %p88 = scmp.eq.s32.totalorder %s19, 0
      %p89 = por %p87, %p88
      %p90 = scmp.ne.s32.totalorder %s76, %s77
      %p91 = scmp.eq.s32.totalorder %s20, 11
      %p92 = por %p90, %p91
      %p94 = scmp.ne.s32.totalorder %s77, %s93
      %p95 = scmp.eq.s32.totalorder %s20, 0
      %p96 = por %p94, %p95
      %s97 = ssub.s32 %s22, %s36
      %p98 = scmp.eq.s32.totalorder %s97, 0
      %s100 = sadd.s32 %s99, 1
      %s101 = scalar_select %p98, %s99, %s100
      %p104 = pneg %p98
      %p105 = scmp.eq.s32.totalorder %s14, 11
      %p106 = por %p104, %p105
      %p107 = scmp.ne.s32.totalorder %s99, %s102
      %p108 = scmp.eq.s32.totalorder %s14, 0
      %p109 = por %p107, %p108
      %p110 = scmp.ne.s32.totalorder %s99, %s102
      %p111 = scmp.eq.s32.totalorder %s19, 11
      %p112 = por %p110, %p111
      %p113 = scmp.ne.s32.totalorder %s102, %s103
      %p114 = scmp.eq.s32.totalorder %s19, 0
      %p115 = por %p113, %p114
      %p116 = scmp.ne.s32.totalorder %s102, %s103
      %p117 = scmp.eq.s32.totalorder %s20, 11
      %p118 = por %p116, %p117
      %p120 = scmp.ne.s32.totalorder %s103, %s119
      %p121 = scmp.eq.s32.totalorder %s20, 0
      %p122 = por %p120, %p121
      %s123 = ssub.s32 %s21, %s40
      %s124 = ssub.s32 %s22, %s36
      %s125 = sor.u32 %s123, %s124
      %p126 = scmp.eq.s32.totalorder %s125, 0
      %s128 = sadd.s32 %s127, 1
      %s129 = scalar_select %p126, %s127, %s128
      %p132 = pneg %p126
      %p133 = scmp.eq.s32.totalorder %s14, 11
      %p134 = por %p132, %p133
      %p135 = scmp.ne.s32.totalorder %s127, %s130
      %p136 = scmp.eq.s32.totalorder %s14, 0
      %p137 = por %p135, %p136
      %p138 = scmp.ne.s32.totalorder %s127, %s130
      %p139 = scmp.eq.s32.totalorder %s19, 11
      %p140 = por %p138, %p139
      %p141 = scmp.ne.s32.totalorder %s130, %s131
      %p142 = scmp.eq.s32.totalorder %s19, 0
      %p143 = por %p141, %p142
      %p144 = scmp.ne.s32.totalorder %s130, %s131
      %p145 = scmp.eq.s32.totalorder %s20, 11
      %p146 = por %p144, %p145
      %p148 = scmp.ne.s32.totalorder %s131, %s147
      %p149 = scmp.eq.s32.totalorder %s20, 0
      %p150 = por %p148, %p149
      %s151 = ssub.s32 %s21, %s40
      %s152 = ssub.s32 %s22, %s36
      %s153 = sor.u32 %s151, %s152
      %p154 = scmp.eq.s32.totalorder %s153, 0
      %s156 = sadd.s32 %s155, 1
      %s157 = scalar_select %p154, %s155, %s156
      %p160 = pneg %p154
      %p161 = scmp.eq.s32.totalorder %s14, 11
      %p162 = por %p160, %p161
      %p163 = scmp.ne.s32.totalorder %s155, %s158
      %p164 = scmp.eq.s32.totalorder %s14, 0
      %p165 = por %p163, %p164
      %p166 = scmp.ne.s32.totalorder %s155, %s158
      %p167 = scmp.eq.s32.totalorder %s19, 11
      %p168 = por %p166, %p167
      %p169 = scmp.ne.s32.totalorder %s158, %s159
      %p170 = scmp.eq.s32.totalorder %s19, 0
      %p171 = por %p169, %p170
      %p172 = scmp.ne.s32.totalorder %s158, %s159
      %p173 = scmp.eq.s32.totalorder %s20, 11
      %p174 = por %p172, %p173
      %p176 = scmp.ne.s32.totalorder %s159, %s175
      %p177 = scmp.eq.s32.totalorder %s20, 0
      %p178 = por %p176, %p177
      %p179 = scmp.le.s32.totalorder 1, %s14
      %p180 = scmp.lt.s32.totalorder %s14, 13
      %p181 = pnand %p179, %p180
      %p182 = pneg %p181
      // Predicated region
      $region9: #{tpu_custom_call.1} parent=5 // pred_check
        _
      $region10: #{tpu_custom_call.1} parent=5 // pred_check_branch
        %184 = sbr.rel (%p181) target = $region12
      $region11: #{tpu_custom_call.1} parent=5 // pred_region
        %s185 = ssub.s32 %s14, 1
      $region12: #{tpu_custom_call.1} parent=5 // pred_fallthru
        _
      %p186 = scmp.lt.s32.totalorder %s14, 12
      // Predicated region
      $region13: #{tpu_custom_call.1} parent=5 // pred_check
        %p187 = pneg %p186
      $region14: #{tpu_custom_call.1} parent=5 // pred_check_branch
        %189 = sbr.rel (%p187) target = $region16
      $region15: #{tpu_custom_call.1} parent=5 // pred_region
        // Predicated region
        $region17: #{tpu_custom_call.1} parent=15 // pred_check
          %p190 = pneg %p55
        $region18: #{tpu_custom_call.1} parent=15 // pred_check_branch
          %192 = sbr.rel (%p190) target = $region20
        $region19: #{tpu_custom_call.1} parent=15 // pred_region
          %s193 = sand.u32 %s45, 1
          %s194 = sand.u32 %s45, 1
          %s195 = smul.addr %s194, 64
          %s196 = scalar_lea.vmem [#allocation2], %s195
          %s197 = smul.u32 16, %s21
          %s198 = ssub.s32 25, %s197
          %p199 = scmp.lt.s32.totalorder %s198, 16
          %s200 = scalar_select %p199, %s198, 16
          %s201 = smul.u32 4, %s200
          %p202 = scmp.ne.s32.totalorder 0, %s201
          %s203 = smul.addr %s197, 3
          %s204 = sadd.s32 %s23, %s203
          %s205 = smul.addr %s204, 4
          %s206 = scalar_lea.vmem %s0, %s205
          // Predicated region
          $region21: #{tpu_custom_call.1} parent=19 // pred_check
            %p207 = pneg %p202
          $region22: #{tpu_custom_call.1} parent=19 // pred_check_branch
            %209 = sbr.rel (%p207) target = $region24
          $region23: #{tpu_custom_call.1} parent=19 // pred_region
            // Predicated region
            $region25: #{tpu_custom_call.1} parent=23 // pred_check
              _
            $region26: #{tpu_custom_call.1} parent=23 // pred_check_branch
              %211 = sbr.rel target = $region28
            $region27: #{tpu_custom_call.1} parent=23 // pred_region
              // Predicated region
              $region47: #{tpu_custom_call.1} parent=27 // pred_check
                _
              $region48: #{tpu_custom_call.1} parent=27 // pred_check_branch
                %291 = sbr.rel (0) target = $region50
              $region49: #{tpu_custom_call.1} parent=27 // pred_region
                %s293 = ssub.s32 16, 1
                %s294 = sshrl.u32 %s200, 4
                // While loop
                $region51: #{tpu_custom_call.1} parent=49 // loop_pre_header
                  _
                $region52: #{tpu_custom_call.1} parent=49 // loop_header
                  %s296 = sphi 0, %s298
                  %p297 = scmp.ge.s32.totalorder %s296, %s294
                  %s301 = sphi 0, %s338
                  %s302 = sphi %s206, %s341
                  %s303 = sphi %s196, %s342
                $region53: #{tpu_custom_call.1} parent=49 // loop_header_branch
                  %300 = sbr.rel (%p297) target = $region57
                $region54: #{tpu_custom_call.1} parent=49 // loop_body
                  %v304 = vld [vmem:[%s302] sm:%s293]
                  %305 = vst [vmem:[%s303] sm:%s293] %v304
                  %v306 = vld [vmem:[%s302 + $0xc] sm:%s293]
                  %307 = vst [vmem:[%s303 + $0x4] sm:%s293] %v306
                  %v308 = vld [vmem:[%s302 + $0x18] sm:%s293]
                  %309 = vst [vmem:[%s303 + $0x8] sm:%s293] %v308
                  %v310 = vld [vmem:[%s302 + $0x24] sm:%s293]
                  %311 = vst [vmem:[%s303 + $0xc] sm:%s293] %v310
                  %v312 = vld [vmem:[%s302 + $0x30] sm:%s293]
                  %313 = vst [vmem:[%s303 + $0x10] sm:%s293] %v312
                  %v314 = vld [vmem:[%s302 + $0x3c] sm:%s293]
                  %315 = vst [vmem:[%s303 + $0x14] sm:%s293] %v314
                  %v316 = vld [vmem:[%s302 + $0x48] sm:%s293]
                  %317 = vst [vmem:[%s303 + $0x18] sm:%s293] %v316
                  %v318 = vld [vmem:[%s302 + $0x54] sm:%s293]
                  %319 = vst [vmem:[%s303 + $0x1c] sm:%s293] %v318
                  %v320 = vld [vmem:[%s302 + $0x60] sm:%s293]
                  %321 = vst [vmem:[%s303 + $0x20] sm:%s293] %v320
                  %v322 = vld [vmem:[%s302 + $0x6c] sm:%s293]
                  %323 = vst [vmem:[%s303 + $0x24] sm:%s293] %v322
                  %v324 = vld [vmem:[%s302 + $0x78] sm:%s293]
                  %325 = vst [vmem:[%s303 + $0x28] sm:%s293] %v324
                  %v326 = vld [vmem:[%s302 + $0x84] sm:%s293]
                  %327 = vst [vmem:[%s303 + $0x2c] sm:%s293] %v326
                  %v328 = vld [vmem:[%s302 + $0x90] sm:%s293]
                  %329 = vst [vmem:[%s303 + $0x30] sm:%s293] %v328
                  %v330 = vld [vmem:[%s302 + $0x9c] sm:%s293]
                  %331 = vst [vmem:[%s303 + $0x34] sm:%s293] %v330
                  %v332 = vld [vmem:[%s302 + $0xa8] sm:%s293]
                  %333 = vst [vmem:[%s303 + $0x38] sm:%s293] %v332
                  %v334 = vld [vmem:[%s302 + $0xb4] sm:%s293]
                  %335 = vst [vmem:[%s303 + $0x3c] sm:%s293] %v334
                  %s336 = sadd.s32 1, %s301
                  %p337 = scmp.ge.s32.totalorder %s336, %s294
                  %s338 = scalar_select %p337, 0, %s336
                  %s339 = smul.u32 %s338, 192
                  %s340 = smul.u32 %s338, 64
                  %s341 = scalar_lea.vmem %s206, %s339
                  %s342 = scalar_lea.vmem %s196, %s340 [#allocation2]
                $region55: #{tpu_custom_call.1} parent=49 // loop_footer
                  %s298 = sadd.s32 %s296, 1
                $region56: #{tpu_custom_call.1} parent=49 // loop_footer_branch
                  %295 = sbr.rel target = $region52
                $region57: #{tpu_custom_call.1} parent=49 // loop_exit
                  _
                %s343 = sshrl.u32 %s200, 4
                %s344 = sand.u32 %s200, 15
                %s345 = smul.u32 %s343, 16
                %s346 = smul.u32 12, %s345
                %s347 = scalar_lea.vmem %s206, %s346
                %s348 = smul.u32 4, %s345
                %s349 = scalar_lea.vmem %s196, %s348 [#allocation2]
                // While loop
                $region58: #{tpu_custom_call.1} parent=49 // loop_pre_header
                  _
                $region59: #{tpu_custom_call.1} parent=49 // loop_header
                  %s351 = sphi 0, %s353
                  %p352 = scmp.ge.s32.totalorder %s351, %s344
                  %s356 = sphi 0, %s363
                  %s357 = sphi %s347, %s366
                  %s358 = sphi %s349, %s367
                $region60: #{tpu_custom_call.1} parent=49 // loop_header_branch
                  %355 = sbr.rel (%p352) target = $region64
                $region61: #{tpu_custom_call.1} parent=49 // loop_body
                  %v359 = vld [vmem:[%s357] sm:%s293]
                  %360 = vst [vmem:[%s358] sm:%s293] %v359
                  %s361 = sadd.s32 1, %s356
                  %p362 = scmp.ge.s32.totalorder %s361, %s344
                  %s363 = scalar_select %p362, 0, %s361
                  %s364 = smul.u32 %s363, 12
                  %s365 = smul.u32 %s363, 4
                  %s366 = scalar_lea.vmem %s347, %s364
                  %s367 = scalar_lea.vmem %s349, %s365 [#allocation2]
                $region62: #{tpu_custom_call.1} parent=49 // loop_footer
                  %s353 = sadd.s32 %s351, 1
                $region63: #{tpu_custom_call.1} parent=49 // loop_footer_branch
                  %350 = sbr.rel target = $region59
                $region64: #{tpu_custom_call.1} parent=49 // loop_exit
                  _
              $region50: #{tpu_custom_call.1} parent=27 // pred_fallthru
                _
            $region28: #{tpu_custom_call.1} parent=23 // pred_fallthru
              _
            // Predicated region
            $region29: #{tpu_custom_call.1} parent=23 // pred_check
              _
            $region30: #{tpu_custom_call.1} parent=23 // pred_check_branch
              %213 = sbr.rel (0) target = $region32
            $region31: #{tpu_custom_call.1} parent=23 // pred_region
              %s215 = ssub.s32 16, 1
              %s216 = sshrl.u32 %s200, 4
              // While loop
              $region33: #{tpu_custom_call.1} parent=31 // loop_pre_header
                _
              $region34: #{tpu_custom_call.1} parent=31 // loop_header
                %s218 = sphi 0, %s220
                %p219 = scmp.ge.s32.totalorder %s218, %s216
                %s223 = sphi 0, %s260
                %s224 = sphi %s206, %s263
                %s225 = sphi %s196, %s264
              $region35: #{tpu_custom_call.1} parent=31 // loop_header_branch
                %222 = sbr.rel (%p219) target = $region39
              $region36: #{tpu_custom_call.1} parent=31 // loop_body
                %v226 = vld [vmem:[%s224] sm:%s215]
                %227 = vst [vmem:[%s225] sm:%s215] %v226
                %v228 = vld [vmem:[%s224 + $0xc] sm:%s215]
                %229 = vst [vmem:[%s225 + $0x4] sm:%s215] %v228
                %v230 = vld [vmem:[%s224 + $0x18] sm:%s215]
                %231 = vst [vmem:[%s225 + $0x8] sm:%s215] %v230
                %v232 = vld [vmem:[%s224 + $0x24] sm:%s215]
                %233 = vst [vmem:[%s225 + $0xc] sm:%s215] %v232
                %v234 = vld [vmem:[%s224 + $0x30] sm:%s215]
                %235 = vst [vmem:[%s225 + $0x10] sm:%s215] %v234
                %v236 = vld [vmem:[%s224 + $0x3c] sm:%s215]
                %237 = vst [vmem:[%s225 + $0x14] sm:%s215] %v236
                %v238 = vld [vmem:[%s224 + $0x48] sm:%s215]
                %239 = vst [vmem:[%s225 + $0x18] sm:%s215] %v238
                %v240 = vld [vmem:[%s224 + $0x54] sm:%s215]
                %241 = vst [vmem:[%s225 + $0x1c] sm:%s215] %v240
                %v242 = vld [vmem:[%s224 + $0x60] sm:%s215]
                %243 = vst [vmem:[%s225 + $0x20] sm:%s215] %v242
                %v244 = vld [vmem:[%s224 + $0x6c] sm:%s215]
                %245 = vst [vmem:[%s225 + $0x24] sm:%s215] %v244
                %v246 = vld [vmem:[%s224 + $0x78] sm:%s215]
                %247 = vst [vmem:[%s225 + $0x28] sm:%s215] %v246
                %v248 = vld [vmem:[%s224 + $0x84] sm:%s215]
                %249 = vst [vmem:[%s225 + $0x2c] sm:%s215] %v248
                %v250 = vld [vmem:[%s224 + $0x90] sm:%s215]
                %251 = vst [vmem:[%s225 + $0x30] sm:%s215] %v250
                %v252 = vld [vmem:[%s224 + $0x9c] sm:%s215]
                %253 = vst [vmem:[%s225 + $0x34] sm:%s215] %v252
                %v254 = vld [vmem:[%s224 + $0xa8] sm:%s215]
                %255 = vst [vmem:[%s225 + $0x38] sm:%s215] %v254
                %v256 = vld [vmem:[%s224 + $0xb4] sm:%s215]
                %257 = vst [vmem:[%s225 + $0x3c] sm:%s215] %v256
                %s258 = sadd.s32 1, %s223
                %p259 = scmp.ge.s32.totalorder %s258, %s216
                %s260 = scalar_select %p259, 0, %s258
                %s261 = smul.u32 %s260, 192
                %s262 = smul.u32 %s260, 64
                %s263 = scalar_lea.vmem %s206, %s261
                %s264 = scalar_lea.vmem %s196, %s262 [#allocation2]
              $region37: #{tpu_custom_call.1} parent=31 // loop_footer
                %s220 = sadd.s32 %s218, 1
              $region38: #{tpu_custom_call.1} parent=31 // loop_footer_branch
                %217 = sbr.rel target = $region34
              $region39: #{tpu_custom_call.1} parent=31 // loop_exit
                _
              %s265 = sshrl.u32 %s200, 4
              %s266 = sand.u32 %s200, 15
              %s267 = smul.u32 %s265, 16
              %s268 = smul.u32 12, %s267
              %s269 = scalar_lea.vmem %s206, %s268
              %s270 = smul.u32 4, %s267
              %s271 = scalar_lea.vmem %s196, %s270 [#allocation2]
              // While loop
              $region40: #{tpu_custom_call.1} parent=31 // loop_pre_header
                _
              $region41: #{tpu_custom_call.1} parent=31 // loop_header
                %s273 = sphi 0, %s275
                %p274 = scmp.ge.s32.totalorder %s273, %s266
                %s278 = sphi 0, %s285
                %s279 = sphi %s269, %s288
                %s280 = sphi %s271, %s289
              $region42: #{tpu_custom_call.1} parent=31 // loop_header_branch
                %277 = sbr.rel (%p274) target = $region46
              $region43: #{tpu_custom_call.1} parent=31 // loop_body
                %v281 = vld [vmem:[%s279] sm:%s215]
                %282 = vst [vmem:[%s280] sm:%s215] %v281
                %s283 = sadd.s32 1, %s278
                %p284 = scmp.ge.s32.totalorder %s283, %s266
                %s285 = scalar_select %p284, 0, %s283
                %s286 = smul.u32 %s285, 12
                %s287 = smul.u32 %s285, 4
                %s288 = scalar_lea.vmem %s269, %s286
                %s289 = scalar_lea.vmem %s271, %s287 [#allocation2]
              $region44: #{tpu_custom_call.1} parent=31 // loop_footer
                %s275 = sadd.s32 %s273, 1
              $region45: #{tpu_custom_call.1} parent=31 // loop_footer_branch
                %272 = sbr.rel target = $region41
              $region46: #{tpu_custom_call.1} parent=31 // loop_exit
                _
            $region32: #{tpu_custom_call.1} parent=23 // pred_fallthru
              _
          $region24: #{tpu_custom_call.1} parent=19 // pred_fallthru
            _
          %368 = vnop
        $region20: #{tpu_custom_call.1} parent=15 // pred_fallthru
          _
        // Predicated region
        $region65: #{tpu_custom_call.1} parent=15 // pred_check
          %p369 = pneg %p83
        $region66: #{tpu_custom_call.1} parent=15 // pred_check_branch
          %371 = sbr.rel (%p369) target = $region68
        $region67: #{tpu_custom_call.1} parent=15 // pred_region
          %s372 = sand.u32 %s73, 1
          %s373 = sand.u32 %s73, 1
          %s374 = smul.addr %s373, 64
          %s375 = scalar_lea.vmem [#allocation3], %s374
          %s376 = smul.u32 16, %s23
          %s377 = smul.addr %s376, 2
          %s378 = sadd.s32 %s22, %s377
          %s379 = smul.addr %s378, 4
          %s380 = scalar_lea.vmem %s1, %s379
          // Predicated region
          $region69: #{tpu_custom_call.1} parent=67 // pred_check
            _
          $region70: #{tpu_custom_call.1} parent=67 // pred_check_branch
            %382 = sbr.rel (0) target = $region72
          $region71: #{tpu_custom_call.1} parent=67 // pred_region
            // Predicated region
            $region73: #{tpu_custom_call.1} parent=71 // pred_check
              _
            $region74: #{tpu_custom_call.1} parent=71 // pred_check_branch
              %384 = sbr.rel target = $region76
            $region75: #{tpu_custom_call.1} parent=71 // pred_region
              // Predicated region
              $region88: #{tpu_custom_call.1} parent=75 // pred_check
                _
              $region89: #{tpu_custom_call.1} parent=75 // pred_check_branch
                %430 = sbr.rel (0) target = $region91
              $region90: #{tpu_custom_call.1} parent=75 // pred_region
                loop: start=0, step=1, limit=1
                $region92: #{tpu_custom_call.1} parent=90 // loop_pre_header
                  _
                $region93: #{tpu_custom_call.1} parent=90 // loop_header
                  %s432 = sphi 0, %s436
                  %p433 = scmp.ge.s32.totalorder %s432, 1
                  %s437 = sphi %s380, %s380
                  %s438 = sphi %s375, %s375
                $region94: #{tpu_custom_call.1} parent=90 // loop_header_branch
                  %435 = sbr.rel (%p433) target = $region98
                $region95: #{tpu_custom_call.1} parent=90 // loop_body
                  _
                $region96: #{tpu_custom_call.1} parent=90 // loop_footer
                  %s436 = sadd.s32 1, %s432
                $region97: #{tpu_custom_call.1} parent=90 // loop_footer_branch
                  %431 = sbr.rel target = $region93
                $region98: #{tpu_custom_call.1} parent=90 // loop_exit
                  _
                %s440 = ssub.s32 16, 1
                loop: start=0, step=1, limit=1
                $region99: #{tpu_custom_call.1} parent=90 // loop_pre_header
                  _
                $region100: #{tpu_custom_call.1} parent=90 // loop_header
                  %s442 = sphi 0, %s446
                  %p443 = scmp.ge.s32.totalorder %s442, 1
                  %s447 = sphi %s380, %s380
                  %s448 = sphi %s375, %s375
                $region101: #{tpu_custom_call.1} parent=90 // loop_header_branch
                  %445 = sbr.rel (%p443) target = $region105
                $region102: #{tpu_custom_call.1} parent=90 // loop_body
                  %v449 = vld [vmem:[%s447] sm:%s440]
                  %450 = vst [vmem:[%s448] sm:%s440] %v449
                  %v451 = vld [vmem:[%s447 + $0x8] sm:%s440]
                  %452 = vst [vmem:[%s448 + $0x4] sm:%s440] %v451
                  %v453 = vld [vmem:[%s447 + $0x10] sm:%s440]
                  %454 = vst [vmem:[%s448 + $0x8] sm:%s440] %v453
                  %v455 = vld [vmem:[%s447 + $0x18] sm:%s440]
                  %456 = vst [vmem:[%s448 + $0xc] sm:%s440] %v455
                  %v457 = vld [vmem:[%s447 + $0x20] sm:%s440]
                  %458 = vst [vmem:[%s448 + $0x10] sm:%s440] %v457
                  %v459 = vld [vmem:[%s447 + $0x28] sm:%s440]
                  %460 = vst [vmem:[%s448 + $0x14] sm:%s440] %v459
                  %v461 = vld [vmem:[%s447 + $0x30] sm:%s440]
                  %462 = vst [vmem:[%s448 + $0x18] sm:%s440] %v461
                  %v463 = vld [vmem:[%s447 + $0x38] sm:%s440]
                  %464 = vst [vmem:[%s448 + $0x1c] sm:%s440] %v463
                  %v465 = vld [vmem:[%s447 + $0x40] sm:%s440]
                  %466 = vst [vmem:[%s448 + $0x20] sm:%s440] %v465
                  %v467 = vld [vmem:[%s447 + $0x48] sm:%s440]
                  %468 = vst [vmem:[%s448 + $0x24] sm:%s440] %v467
                  %v469 = vld [vmem:[%s447 + $0x50] sm:%s440]
                  %470 = vst [vmem:[%s448 + $0x28] sm:%s440] %v469
                  %v471 = vld [vmem:[%s447 + $0x58] sm:%s440]
                  %472 = vst [vmem:[%s448 + $0x2c] sm:%s440] %v471
                  %v473 = vld [vmem:[%s447 + $0x60] sm:%s440]
                  %474 = vst [vmem:[%s448 + $0x30] sm:%s440] %v473
                  %v475 = vld [vmem:[%s447 + $0x68] sm:%s440]
                  %476 = vst [vmem:[%s448 + $0x34] sm:%s440] %v475
                  %v477 = vld [vmem:[%s447 + $0x70] sm:%s440]
                  %478 = vst [vmem:[%s448 + $0x38] sm:%s440] %v477
                  %v479 = vld [vmem:[%s447 + $0x78] sm:%s440]
                  %480 = vst [vmem:[%s448 + $0x3c] sm:%s440] %v479
                $region103: #{tpu_custom_call.1} parent=90 // loop_footer
                  %s446 = sadd.s32 1, %s442
                $region104: #{tpu_custom_call.1} parent=90 // loop_footer_branch
                  %441 = sbr.rel target = $region100
                $region105: #{tpu_custom_call.1} parent=90 // loop_exit
                  _
              $region91: #{tpu_custom_call.1} parent=75 // pred_fallthru
                _
            $region76: #{tpu_custom_call.1} parent=71 // pred_fallthru
              _
            // Predicated region
            $region77: #{tpu_custom_call.1} parent=71 // pred_check
              _
            $region78: #{tpu_custom_call.1} parent=71 // pred_check_branch
              %386 = sbr.rel (0) target = $region80
            $region79: #{tpu_custom_call.1} parent=71 // pred_region
              %s388 = ssub.s32 16, 1
              loop: start=0, step=1, limit=1
              $region81: #{tpu_custom_call.1} parent=79 // loop_pre_header
                _
              $region82: #{tpu_custom_call.1} parent=79 // loop_header
                %s390 = sphi 0, %s394
                %p391 = scmp.ge.s32.totalorder %s390, 1
                %s395 = sphi %s380, %s380
                %s396 = sphi %s375, %s375
              $region83: #{tpu_custom_call.1} parent=79 // loop_header_branch
                %393 = sbr.rel (%p391) target = $region87
              $region84: #{tpu_custom_call.1} parent=79 // loop_body
                %v397 = vld [vmem:[%s395] sm:%s388]
                %398 = vst [vmem:[%s396] sm:%s388] %v397
                %v399 = vld [vmem:[%s395 + $0x8] sm:%s388]
                %400 = vst [vmem:[%s396 + $0x4] sm:%s388] %v399
                %v401 = vld [vmem:[%s395 + $0x10] sm:%s388]
                %402 = vst [vmem:[%s396 + $0x8] sm:%s388] %v401
                %v403 = vld [vmem:[%s395 + $0x18] sm:%s388]
                %404 = vst [vmem:[%s396 + $0xc] sm:%s388] %v403
                %v405 = vld [vmem:[%s395 + $0x20] sm:%s388]
                %406 = vst [vmem:[%s396 + $0x10] sm:%s388] %v405
                %v407 = vld [vmem:[%s395 + $0x28] sm:%s388]
                %408 = vst [vmem:[%s396 + $0x14] sm:%s388] %v407
                %v409 = vld [vmem:[%s395 + $0x30] sm:%s388]
                %410 = vst [vmem:[%s396 + $0x18] sm:%s388] %v409
                %v411 = vld [vmem:[%s395 + $0x38] sm:%s388]
                %412 = vst [vmem:[%s396 + $0x1c] sm:%s388] %v411
                %v413 = vld [vmem:[%s395 + $0x40] sm:%s388]
                %414 = vst [vmem:[%s396 + $0x20] sm:%s388] %v413
                %v415 = vld [vmem:[%s395 + $0x48] sm:%s388]
                %416 = vst [vmem:[%s396 + $0x24] sm:%s388] %v415
                %v417 = vld [vmem:[%s395 + $0x50] sm:%s388]
                %418 = vst [vmem:[%s396 + $0x28] sm:%s388] %v417
                %v419 = vld [vmem:[%s395 + $0x58] sm:%s388]
                %420 = vst [vmem:[%s396 + $0x2c] sm:%s388] %v419
                %v421 = vld [vmem:[%s395 + $0x60] sm:%s388]
                %422 = vst [vmem:[%s396 + $0x30] sm:%s388] %v421
                %v423 = vld [vmem:[%s395 + $0x68] sm:%s388]
                %424 = vst [vmem:[%s396 + $0x34] sm:%s388] %v423
                %v425 = vld [vmem:[%s395 + $0x70] sm:%s388]
                %426 = vst [vmem:[%s396 + $0x38] sm:%s388] %v425
                %v427 = vld [vmem:[%s395 + $0x78] sm:%s388]
                %428 = vst [vmem:[%s396 + $0x3c] sm:%s388] %v427
              $region85: #{tpu_custom_call.1} parent=79 // loop_footer
                %s394 = sadd.s32 1, %s390
              $region86: #{tpu_custom_call.1} parent=79 // loop_footer_branch
                %389 = sbr.rel target = $region82
              $region87: #{tpu_custom_call.1} parent=79 // loop_exit
                _
            $region80: #{tpu_custom_call.1} parent=71 // pred_fallthru
              _
          $region72: #{tpu_custom_call.1} parent=67 // pred_fallthru
            _
          %481 = vnop
        $region68: #{tpu_custom_call.1} parent=15 // pred_fallthru
          _
        // Predicated region
        $region106: #{tpu_custom_call.1} parent=15 // pred_check
          %p482 = pneg %p109
        $region107: #{tpu_custom_call.1} parent=15 // pred_check_branch
          %484 = sbr.rel (%p482) target = $region109
        $region108: #{tpu_custom_call.1} parent=15 // pred_region
          %p485 = scmp.lt.s32.totalorder %s22, 1
          %s486 = scalar_select %p485, %s22, 1
          %s487 = scalar_lea.vmem %s2, %s486
        $region109: #{tpu_custom_call.1} parent=15 // pred_fallthru
          _
      $region16: #{tpu_custom_call.1} parent=5 // pred_fallthru
        _
      %p488 = scmp.le.s32.totalorder 1, %s14
      %p489 = scmp.lt.s32.totalorder %s14, 13
      %p490 = pnand %p488, %p489
      %p491 = pneg %p490
      // Predicated region
      $region110: #{tpu_custom_call.1} parent=5 // pred_check
        _
      $region111: #{tpu_custom_call.1} parent=5 // pred_check_branch
        %493 = sbr.rel (%p490) target = $region113
      $region112: #{tpu_custom_call.1} parent=5 // pred_region
        %s494 = ssub.s32 %s14, 1
        %s495 = sand.u32 %s48, 1
        %s496 = sand.u32 %s48, 1
        %s497 = smul.addr %s496, 64
        %s498 = scalar_lea.vmem [#allocation2], %s497
        // Predicated region
        $region114: #{tpu_custom_call.1} parent=112 // pred_check
          %p499 = pneg %p61
        $region115: #{tpu_custom_call.1} parent=112 // pred_check_branch
          %501 = sbr.rel (%p499) target = $region117
        $region116: #{tpu_custom_call.1} parent=112 // pred_region
          _
        $region117: #{tpu_custom_call.1} parent=112 // pred_fallthru
          _
        %s502 = sand.u32 %s76, 1
        %s503 = sand.u32 %s76, 1
        %s504 = smul.addr %s503, 64
        %s505 = scalar_lea.vmem [#allocation3], %s504
        // Predicated region
        $region118: #{tpu_custom_call.1} parent=112 // pred_check
          %p506 = pneg %p89
        $region119: #{tpu_custom_call.1} parent=112 // pred_check_branch
          %508 = sbr.rel (%p506) target = $region121
        $region120: #{tpu_custom_call.1} parent=112 // pred_region
          _
        $region121: #{tpu_custom_call.1} parent=112 // pred_fallthru
          _
        %s509 = sand.u32 %s48, 1
        %s510 = sand.u32 %s48, 1
        %s511 = smul.addr %s510, 64
        %s512 = scalar_lea.vmem [#allocation2], %s511
        %p513 = pneg %p61
        %p514 = pneg %p58
        %s515 = sand.u32 %s76, 1
        %s516 = sand.u32 %s76, 1
        %s517 = smul.addr %s516, 64
        %s518 = scalar_lea.vmem [#allocation3], %s517
        %p519 = pneg %p89
        %p520 = pneg %p86
        %p521 = scmp.lt.s32.totalorder %s25, 1
        %s522 = scalar_select %p521, %s25, 1
        %s523 = scalar_lea.vmem %s2, %s522
        %p524 = pneg %p115
        %p525 = pneg %p112
        %p526 = pneg %p143
        %p527 = pneg %p140
        %s528 = sand.u32 %s130, 1
        %s529 = sand.u32 %s130, 1
        %s530 = smul.addr %s529, 128
        %s531 = scalar_lea.vmem [#allocation4], %s530
        %p532 = pneg %p171
        %p533 = pneg %p168
        %s534 = sand.u32 %s158, 1
        %s535 = scalar_lea.sflag [#allocation6], %s534
        %s536 = sand.u32 %s158, 1
        %s537 = smul.addr %s536, 8
        %s538 = scalar_lea.vmem [#allocation5], %s537
        %s539 = smul.u32 16, %s24
        %s540 = ssub.s32 25, %s539
        %p541 = scmp.lt.s32.totalorder %s540, 16
        %s542 = scalar_select %p541, %s540, 16
        %s543 = smul.u32 4, %s542
        %s544 = smul.u32 16, %s26
        %p545 = scmp.lt.s32.totalorder %s25, 1
        %s546 = scalar_select %p545, %s25, 1
        %s547 = scalar_lea.vmem %s2, %s546
        %s548 = smul.u32 16, %s24
        %s549 = ssub.s32 25, %s548
        %p550 = scmp.lt.s32.totalorder %s549, 16
        %s551 = scalar_select %p550, %s549, 16
        %s552 = smul.u32 8, %s551
        %p553 = scmp.eq.s32.totalorder %s26, 0
        // Predicated region
        $region122: #{tpu_custom_call.1} parent=112 // pred_check
          %p554 = pneg %p553
        $region123: #{tpu_custom_call.1} parent=112 // pred_check_branch
          %556 = sbr.rel (%p554) target = $region125
        $region124: #{tpu_custom_call.1} parent=112 // pred_region
          %557 = vst [vmem:[%s531] sm:$0xff] 0.0
          %558 = vst [vmem:[%s531 + $0x8] sm:$0xff] 0.0
          %559 = vst [vmem:[%s531 + $0x10] sm:$0xff] 0.0
          %560 = vst [vmem:[%s531 + $0x18] sm:$0xff] 0.0
          %561 = vst [vmem:[%s531 + $0x20] sm:$0xff] 0.0
          %562 = vst [vmem:[%s531 + $0x28] sm:$0xff] 0.0
          %563 = vst [vmem:[%s531 + $0x30] sm:$0xff] 0.0
          %564 = vst [vmem:[%s531 + $0x38] sm:$0xff] 0.0
          %565 = vst [vmem:[%s531 + $0x40] sm:$0xff] 0.0
          %566 = vst [vmem:[%s531 + $0x48] sm:$0xff] 0.0
          %567 = vst [vmem:[%s531 + $0x50] sm:$0xff] 0.0
          %568 = vst [vmem:[%s531 + $0x58] sm:$0xff] 0.0
          %569 = vst [vmem:[%s531 + $0x60] sm:$0xff] 0.0
          %570 = vst [vmem:[%s531 + $0x68] sm:$0xff] 0.0
          %571 = vst [vmem:[%s531 + $0x70] sm:$0xff] 0.0
          %572 = vst [vmem:[%s531 + $0x78] sm:$0xff] 0.0
        $region125: #{tpu_custom_call.1} parent=112 // pred_fallthru
          _
        %v573 = vld [vmem:[%s531] sm:$0xff]
        %v574 = vld [vmem:[%s531 + $0x8] sm:$0xff]
        %v575 = vld [vmem:[%s531 + $0x10] sm:$0xff]
        %v576 = vld [vmem:[%s531 + $0x18] sm:$0xff]
        %v577 = vld [vmem:[%s531 + $0x20] sm:$0xff]
        %v578 = vld [vmem:[%s531 + $0x28] sm:$0xff]
        %v579 = vld [vmem:[%s531 + $0x30] sm:$0xff]
        %v580 = vld [vmem:[%s531 + $0x38] sm:$0xff]
        %v581 = vld [vmem:[%s531 + $0x40] sm:$0xff]
        %v582 = vld [vmem:[%s531 + $0x48] sm:$0xff]
        %v583 = vld [vmem:[%s531 + $0x50] sm:$0xff]
        %v584 = vld [vmem:[%s531 + $0x58] sm:$0xff]
        %v585 = vld [vmem:[%s531 + $0x60] sm:$0xff]
        %v586 = vld [vmem:[%s531 + $0x68] sm:$0xff]
        %v587 = vld [vmem:[%s531 + $0x70] sm:$0xff]
        %v588 = vld [vmem:[%s531 + $0x78] sm:$0xff]
        %v589 = vld [vmem:[%s498] sm:$0xf]
        %v590 = vld [vmem:[%s498 + $0x4] sm:$0xf]
        %v591 = vld [vmem:[%s498 + $0x8] sm:$0xf]
        %v592 = vld [vmem:[%s498 + $0xc] sm:$0xf]
        %v593 = vld [vmem:[%s498 + $0x10] sm:$0xf]
        %v594 = vld [vmem:[%s498 + $0x14] sm:$0xf]
        %v595 = vld [vmem:[%s498 + $0x18] sm:$0xf]
        %v596 = vld [vmem:[%s498 + $0x1c] sm:$0xf]
        %v597 = vld [vmem:[%s498 + $0x20] sm:$0xf]
        %v598 = vld [vmem:[%s498 + $0x24] sm:$0xf]
        %v599 = vld [vmem:[%s498 + $0x28] sm:$0xf]
        %v600 = vld [vmem:[%s498 + $0x2c] sm:$0xf]
        %v601 = vld [vmem:[%s498 + $0x30] sm:$0xf]
        %v602 = vld [vmem:[%s498 + $0x34] sm:$0xf]
        %v603 = vld [vmem:[%s498 + $0x38] sm:$0xf]
        %v604 = vld [vmem:[%s498 + $0x3c] sm:$0xf]
        %v605 = vld [vmem:[%s505] sm:$0xf]
        %v606 = vld [vmem:[%s505 + $0x4] sm:$0xf]
        %v607 = vld [vmem:[%s505 + $0x8] sm:$0xf]
        %v608 = vld [vmem:[%s505 + $0xc] sm:$0xf]
        %v609 = vld [vmem:[%s505 + $0x10] sm:$0xf]
        %v610 = vld [vmem:[%s505 + $0x14] sm:$0xf]
        %v611 = vld [vmem:[%s505 + $0x18] sm:$0xf]
        %v612 = vld [vmem:[%s505 + $0x1c] sm:$0xf]
        %v613 = vld [vmem:[%s505 + $0x20] sm:$0xf]
        %v614 = vld [vmem:[%s505 + $0x24] sm:$0xf]
        %v615 = vld [vmem:[%s505 + $0x28] sm:$0xf]
        %v616 = vld [vmem:[%s505 + $0x2c] sm:$0xf]
        %v617 = vld [vmem:[%s505 + $0x30] sm:$0xf]
        %v618 = vld [vmem:[%s505 + $0x34] sm:$0xf]
        %v619 = vld [vmem:[%s505 + $0x38] sm:$0xf]
        %v620 = vld [vmem:[%s505 + $0x3c] sm:$0xf]
        %v637 = vunpack.c.l.b16 %v589
        %v638 = vunpack.c.l.b16 %v590
        %v639 = vunpack.c.l.b16 %v591
        %v640 = vunpack.c.l.b16 %v592
        %v641 = vunpack.c.l.b16 %v593
        %v642 = vunpack.c.l.b16 %v594
        %v643 = vunpack.c.l.b16 %v595
        %v644 = vunpack.c.l.b16 %v596
        %v645 = vunpack.c.l.b16 %v597
        %v646 = vunpack.c.l.b16 %v598
        %v647 = vunpack.c.l.b16 %v599
        %v648 = vunpack.c.l.b16 %v600
        %v649 = vunpack.c.l.b16 %v601
        %v650 = vunpack.c.l.b16 %v602
        %v651 = vunpack.c.l.b16 %v603
        %v652 = vunpack.c.l.b16 %v604
        %v653 = vpack.c.b16 %v638, %v637
        %v654 = vpack.c.b16 %v640, %v639
        %v655 = vpack.c.b16 %v642, %v641
        %v656 = vpack.c.b16 %v644, %v643
        %v657 = vpack.c.b16 %v646, %v645
        %v658 = vpack.c.b16 %v648, %v647
        %v659 = vpack.c.b16 %v650, %v649
        %v660 = vpack.c.b16 %v652, %v651
        %v685 = vunpack.c.l.b16 %v605
        %v686 = vunpack.c.l.b16 %v606
        %v687 = vunpack.c.l.b16 %v607
        %v688 = vunpack.c.l.b16 %v608
        %v689 = vunpack.c.l.b16 %v609
        %v690 = vunpack.c.l.b16 %v610
        %v691 = vunpack.c.l.b16 %v611
        %v692 = vunpack.c.l.b16 %v612
        %v693 = vunpack.c.l.b16 %v613
        %v694 = vunpack.c.l.b16 %v614
        %v695 = vunpack.c.l.b16 %v615
        %v696 = vunpack.c.l.b16 %v616
        %v697 = vunpack.c.l.b16 %v617
        %v698 = vunpack.c.l.b16 %v618
        %v699 = vunpack.c.l.b16 %v619
        %v700 = vunpack.c.l.b16 %v620
        %v701 = vpack.c.b16 %v686, %v685
        %v702 = vpack.c.b16 %v688, %v687
        %v703 = vpack.c.b16 %v690, %v689
        %v704 = vpack.c.b16 %v692, %v691
        %v705 = vpack.c.b16 %v694, %v693
        %v706 = vpack.c.b16 %v696, %v695
        %v707 = vpack.c.b16 %v698, %v697
        %v708 = vpack.c.b16 %v700, %v699
        %717 = vmatpush.bf16.msra.mxu0 %v708
        %718 = vmatpush.bf16.msra.mxu0 %v707
        %719 = vmatpush.bf16.msra.mxu0 %v706
        %720 = vmatpush.bf16.msra.mxu0 %v705
        %721 = vmatpush.bf16.msra.mxu0 %v704
        %722 = vmatpush.bf16.msra.mxu0 %v703
        %723 = vmatpush.bf16.msra.mxu0 %v702
        %724 = vmatpush.bf16.msra.mxu0 %v701
        %725 = vmatmul.bf16.gmra.mxu0 %v653
        %v726 = vpop.f32.mrf.mxu0
        %v727 = vadd.f32 0.0, %v726
        %v728 = vpop.f32.mrf.mxu0
        %v729 = vadd.f32 0.0, %v728
        %730 = vmatmul.bf16.gmra.mxu0 %v654
        %v731 = vpop.f32.mrf.mxu0
        %v732 = vadd.f32 0.0, %v731
        %v733 = vpop.f32.mrf.mxu0
        %v734 = vadd.f32 0.0, %v733
        %735 = vmatmul.bf16.gmra.mxu0 %v655
        %v736 = vpop.f32.mrf.mxu0
        %v737 = vadd.f32 0.0, %v736
        %v738 = vpop.f32.mrf.mxu0
        %v739 = vadd.f32 0.0, %v738
        %740 = vmatmul.bf16.gmra.mxu0 %v656
        %v741 = vpop.f32.mrf.mxu0
        %v742 = vadd.f32 0.0, %v741
        %v743 = vpop.f32.mrf.mxu0
        %v744 = vadd.f32 0.0, %v743
        %745 = vmatmul.bf16.gmra.mxu0 %v657
        %v746 = vpop.f32.mrf.mxu0
        %v747 = vadd.f32 0.0, %v746
        %v748 = vpop.f32.mrf.mxu0
        %v749 = vadd.f32 0.0, %v748
        %750 = vmatmul.bf16.gmra.mxu0 %v658
        %v751 = vpop.f32.mrf.mxu0
        %v752 = vadd.f32 0.0, %v751
        %v753 = vpop.f32.mrf.mxu0
        %v754 = vadd.f32 0.0, %v753
        %755 = vmatmul.bf16.gmra.mxu0 %v659
        %v756 = vpop.f32.mrf.mxu0
        %v757 = vadd.f32 0.0, %v756
        %v758 = vpop.f32.mrf.mxu0
        %v759 = vadd.f32 0.0, %v758
        %760 = vmatmul.bf16.gmra.mxu0 %v660
        %v761 = vpop.f32.mrf.mxu0
        %v762 = vadd.f32 0.0, %v761
        %v763 = vpop.f32.mrf.mxu0
        %v764 = vadd.f32 0.0, %v763
        %765 = vdwg.mxu0
        %v766 = vadd.f32 %v573, %v727
        %v767 = vadd.f32 %v574, %v729
        %v768 = vadd.f32 %v575, %v732
        %v769 = vadd.f32 %v576, %v734
        %v770 = vadd.f32 %v577, %v737
        %v771 = vadd.f32 %v578, %v739
        %v772 = vadd.f32 %v579, %v742
        %v773 = vadd.f32 %v580, %v744
        %v774 = vadd.f32 %v581, %v747
        %v775 = vadd.f32 %v582, %v749
        %v776 = vadd.f32 %v583, %v752
        %v777 = vadd.f32 %v584, %v754
        %v778 = vadd.f32 %v585, %v757
        %v779 = vadd.f32 %v586, %v759
        %v780 = vadd.f32 %v587, %v762
        %v781 = vadd.f32 %v588, %v764
        %782 = vst [vmem:[%s531] sm:$0xff] %v766
        %783 = vst [vmem:[%s531 + $0x8] sm:$0xff] %v767
        %784 = vst [vmem:[%s531 + $0x10] sm:$0xff] %v768
        %785 = vst [vmem:[%s531 + $0x18] sm:$0xff] %v769
        %786 = vst [vmem:[%s531 + $0x20] sm:$0xff] %v770
        %787 = vst [vmem:[%s531 + $0x28] sm:$0xff] %v771
        %788 = vst [vmem:[%s531 + $0x30] sm:$0xff] %v772
        %789 = vst [vmem:[%s531 + $0x38] sm:$0xff] %v773
        %790 = vst [vmem:[%s531 + $0x40] sm:$0xff] %v774
        %791 = vst [vmem:[%s531 + $0x48] sm:$0xff] %v775
        %792 = vst [vmem:[%s531 + $0x50] sm:$0xff] %v776
        %793 = vst [vmem:[%s531 + $0x58] sm:$0xff] %v777
        %794 = vst [vmem:[%s531 + $0x60] sm:$0xff] %v778
        %795 = vst [vmem:[%s531 + $0x68] sm:$0xff] %v779
        %796 = vst [vmem:[%s531 + $0x70] sm:$0xff] %v780
        %797 = vst [vmem:[%s531 + $0x78] sm:$0xff] %v781
        %p798 = scmp.eq.s32.totalorder %s26, 2
        // Predicated region
        $region126: #{tpu_custom_call.1} parent=112 // pred_check
          %p799 = pneg %p798
        $region127: #{tpu_custom_call.1} parent=112 // pred_check_branch
          %801 = sbr.rel (%p799) target = $region129
        $region128: #{tpu_custom_call.1} parent=112 // pred_region
          %v802 = vld [vmem:[%s531] sm:$0xff]
          %v803 = vld [vmem:[%s531 + $0x8] sm:$0xff]
          %v804 = vld [vmem:[%s531 + $0x10] sm:$0xff]
          %v805 = vld [vmem:[%s531 + $0x18] sm:$0xff]
          %v806 = vld [vmem:[%s531 + $0x20] sm:$0xff]
          %v807 = vld [vmem:[%s531 + $0x28] sm:$0xff]
          %v808 = vld [vmem:[%s531 + $0x30] sm:$0xff]
          %v809 = vld [vmem:[%s531 + $0x38] sm:$0xff]
          %v810 = vld [vmem:[%s531 + $0x40] sm:$0xff]
          %v811 = vld [vmem:[%s531 + $0x48] sm:$0xff]
          %v812 = vld [vmem:[%s531 + $0x50] sm:$0xff]
          %v813 = vld [vmem:[%s531 + $0x58] sm:$0xff]
          %v814 = vld [vmem:[%s531 + $0x60] sm:$0xff]
          %v815 = vld [vmem:[%s531 + $0x68] sm:$0xff]
          %v816 = vld [vmem:[%s531 + $0x70] sm:$0xff]
          %v817 = vld [vmem:[%s531 + $0x78] sm:$0xff]
          %v818 = vld [vmem:[%s547] sm:$0x1]
          %v820 = vperm.slane %v818, 0
          %v822 = vadd.f32 %v802, %v820
          %v823 = vadd.f32 %v803, %v820
          %v824 = vadd.f32 %v804, %v820
          %v825 = vadd.f32 %v805, %v820
          %v826 = vadd.f32 %v806, %v820
          %v827 = vadd.f32 %v807, %v820
          %v828 = vadd.f32 %v808, %v820
          %v829 = vadd.f32 %v809, %v820
          %v830 = vadd.f32 %v810, %v820
          %v831 = vadd.f32 %v811, %v820
          %v832 = vadd.f32 %v812, %v820
          %v833 = vadd.f32 %v813, %v820
          %v834 = vadd.f32 %v814, %v820
          %v835 = vadd.f32 %v815, %v820
          %v836 = vadd.f32 %v816, %v820
          %v837 = vadd.f32 %v817, %v820
          %v838 = vadd.f32 %v822, 0.05
          %v839 = vadd.f32 %v823, 0.05
          %v840 = vadd.f32 %v824, 0.05
          %v841 = vadd.f32 %v825, 0.05
          %v842 = vadd.f32 %v826, 0.05
          %v843 = vadd.f32 %v827, 0.05
          %v844 = vadd.f32 %v828, 0.05
          %v845 = vadd.f32 %v829, 0.05
          %v846 = vadd.f32 %v830, 0.05
          %v847 = vadd.f32 %v831, 0.05
          %v848 = vadd.f32 %v832, 0.05
          %v849 = vadd.f32 %v833, 0.05
          %v850 = vadd.f32 %v834, 0.05
          %v851 = vadd.f32 %v835, 0.05
          %v852 = vadd.f32 %v836, 0.05
          %v853 = vadd.f32 %v837, 0.05
          %v854 = vmax.f32 %v838, 0.0
          %v855 = vmax.f32 %v839, 0.0
          %v856 = vmax.f32 %v840, 0.0
          %v857 = vmax.f32 %v841, 0.0
          %v858 = vmax.f32 %v842, 0.0
          %v859 = vmax.f32 %v843, 0.0
          %v860 = vmax.f32 %v844, 0.0
          %v861 = vmax.f32 %v845, 0.0
          %v862 = vmax.f32 %v846, 0.0
          %v863 = vmax.f32 %v847, 0.0
          %v864 = vmax.f32 %v848, 0.0
          %v865 = vmax.f32 %v849, 0.0
          %v866 = vmax.f32 %v850, 0.0
          %v867 = vmax.f32 %v851, 0.0
          %v868 = vmax.f32 %v852, 0.0
          %v869 = vmax.f32 %v853, 0.0
          %870 = vst [vmem:[%s531] sm:$0xff] %v854
          %871 = vst [vmem:[%s531 + $0x8] sm:$0xff] %v855
          %872 = vst [vmem:[%s531 + $0x10] sm:$0xff] %v856
          %873 = vst [vmem:[%s531 + $0x18] sm:$0xff] %v857
          %874 = vst [vmem:[%s531 + $0x20] sm:$0xff] %v858
          %875 = vst [vmem:[%s531 + $0x28] sm:$0xff] %v859
          %876 = vst [vmem:[%s531 + $0x30] sm:$0xff] %v860
          %877 = vst [vmem:[%s531 + $0x38] sm:$0xff] %v861
          %878 = vst [vmem:[%s531 + $0x40] sm:$0xff] %v862
          %879 = vst [vmem:[%s531 + $0x48] sm:$0xff] %v863
          %880 = vst [vmem:[%s531 + $0x50] sm:$0xff] %v864
          %881 = vst [vmem:[%s531 + $0x58] sm:$0xff] %v865
          %882 = vst [vmem:[%s531 + $0x60] sm:$0xff] %v866
          %883 = vst [vmem:[%s531 + $0x68] sm:$0xff] %v867
          %884 = vst [vmem:[%s531 + $0x70] sm:$0xff] %v868
          %885 = vst [vmem:[%s531 + $0x78] sm:$0xff] %v869
          %v886 = vlaneseq
          %v887 = vshrl.u32 %v886, 7
          %v888 = vadd.s32 %v887, 8
          %v889 = vadd.s32 %v887, 16
          %v890 = vadd.s32 %v887, 24
          %v891 = vadd.s32 %v887, 32
          %v892 = vadd.s32 %v887, 40
          %v893 = vadd.s32 %v887, 48
          %v894 = vadd.s32 %v887, 56
          %v895 = vadd.s32 %v887, 64
          %v896 = vadd.s32 %v887, 72
          %v897 = vadd.s32 %v887, 80
          %v898 = vadd.s32 %v887, 88
          %v899 = vadd.s32 %v887, 96
          %v900 = vadd.s32 %v887, 104
          %v901 = vadd.s32 %v887, 112
          %v902 = vadd.s32 %v887, 120
          %s903 = smul.u32 %s24, 128
          %v904 = vstv %s903
          %v905 = vadd.s32 %v887, %v904
          %v906 = vadd.s32 %v888, %v904
          %v907 = vadd.s32 %v889, %v904
          %v908 = vadd.s32 %v890, %v904
          %v909 = vadd.s32 %v891, %v904
          %v910 = vadd.s32 %v892, %v904
          %v911 = vadd.s32 %v893, %v904
          %v912 = vadd.s32 %v894, %v904
          %v913 = vadd.s32 %v895, %v904
          %v914 = vadd.s32 %v896, %v904
          %v915 = vadd.s32 %v897, %v904
          %v916 = vadd.s32 %v898, %v904
          %v917 = vadd.s32 %v899, %v904
          %v918 = vadd.s32 %v900, %v904
          %v919 = vadd.s32 %v901, %v904
          %v920 = vadd.s32 %v902, %v904
          %vm921 = vcmp.lt.s32.totalorder %v905, 200
          %vm922 = vcmp.lt.s32.totalorder %v906, 200
          %vm923 = vcmp.lt.s32.totalorder %v907, 200
          %vm924 = vcmp.lt.s32.totalorder %v908, 200
          %vm925 = vcmp.lt.s32.totalorder %v909, 200
          %vm926 = vcmp.lt.s32.totalorder %v910, 200
          %vm927 = vcmp.lt.s32.totalorder %v911, 200
          %vm928 = vcmp.lt.s32.totalorder %v912, 200
          %vm929 = vcmp.lt.s32.totalorder %v913, 200
          %vm930 = vcmp.lt.s32.totalorder %v914, 200
          %vm931 = vcmp.lt.s32.totalorder %v915, 200
          %vm932 = vcmp.lt.s32.totalorder %v916, 200
          %vm933 = vcmp.lt.s32.totalorder %v917, 200
          %vm934 = vcmp.lt.s32.totalorder %v918, 200
          %vm935 = vcmp.lt.s32.totalorder %v919, 200
          %vm936 = vcmp.lt.s32.totalorder %v920, 200
          %v937 = vlaneseq
          %v938 = vand.u32 %v937, 127
          %s939 = smul.u32 %s25, 128
          %v940 = vstv %s939
          %v941 = vadd.s32 %v938, %v940
          %vm942 = vcmp.lt.s32.totalorder %v941, 192
          %vm943 = vmand %vm921, %vm942
          %vm944 = vmand %vm922, %vm942
          %vm945 = vmand %vm923, %vm942
          %vm946 = vmand %vm924, %vm942
          %vm947 = vmand %vm925, %vm942
          %vm948 = vmand %vm926, %vm942
          %vm949 = vmand %vm927, %vm942
          %vm950 = vmand %vm928, %vm942
          %vm951 = vmand %vm929, %vm942
          %vm952 = vmand %vm930, %vm942
          %vm953 = vmand %vm931, %vm942
          %vm954 = vmand %vm932, %vm942
          %vm955 = vmand %vm933, %vm942
          %vm956 = vmand %vm934, %vm942
          %vm957 = vmand %vm935, %vm942
          %vm958 = vmand %vm936, %vm942
          %v959 = vsel %vm943, %v822, 0.0
          %v960 = vsel %vm944, %v823, 0.0
          %v961 = vsel %vm945, %v824, 0.0
          %v962 = vsel %vm946, %v825, 0.0
          %v963 = vsel %vm947, %v826, 0.0
          %v964 = vsel %vm948, %v827, 0.0
          %v965 = vsel %vm949, %v828, 0.0
          %v966 = vsel %vm950, %v829, 0.0
          %v967 = vsel %vm951, %v830, 0.0
          %v968 = vsel %vm952, %v831, 0.0
          %v969 = vsel %vm953, %v832, 0.0
          %v970 = vsel %vm954, %v833, 0.0
          %v971 = vsel %vm955, %v834, 0.0
          %v972 = vsel %vm956, %v835, 0.0
          %v973 = vsel %vm957, %v836, 0.0
          %v974 = vsel %vm958, %v837, 0.0
          %v975 = vadd.f32 %v959, %v960
          %v976 = vadd.f32 %v975, %v961
          %v977 = vadd.f32 %v976, %v962
          %v978 = vadd.f32 %v977, %v963
          %v979 = vadd.f32 %v978, %v964
          %v980 = vadd.f32 %v979, %v965
          %v981 = vadd.f32 %v980, %v966
          %v982 = vadd.f32 %v981, %v967
          %v983 = vadd.f32 %v982, %v968
          %v984 = vadd.f32 %v983, %v969
          %v985 = vadd.f32 %v984, %v970
          %v986 = vadd.f32 %v985, %v971
          %v987 = vadd.f32 %v986, %v972
          %v988 = vadd.f32 %v987, %v973
          %v989 = vadd.f32 %v988, %v974
          %990 = vadd.xlane.f32.xlu0 %v989
          %v991 = vpop.xlane.xlu0 %990
          %v992 = vrot.slane %v991, 4
          %v993 = vadd.f32 %v991, %v992
          %v994 = vrot.slane %v993, 2
          %v995 = vadd.f32 %v993, %v994
          %v996 = vrot.slane %v995, 1
          %v997 = vadd.f32 %v995, %v996
          %s998 = vtos %v997
          %v999 = vmul.f32 %v959, %v959
          %v1000 = vmul.f32 %v960, %v960
          %v1001 = vmul.f32 %v961, %v961
          %v1002 = vmul.f32 %v962, %v962
          %v1003 = vmul.f32 %v963, %v963
          %v1004 = vmul.f32 %v964, %v964
          %v1005 = vmul.f32 %v965, %v965
          %v1006 = vmul.f32 %v966, %v966
          %v1007 = vmul.f32 %v967, %v967
          %v1008 = vmul.f32 %v968, %v968
          %v1009 = vmul.f32 %v969, %v969
          %v1010 = vmul.f32 %v970, %v970
          %v1011 = vmul.f32 %v971, %v971
          %v1012 = vmul.f32 %v972, %v972
          %v1013 = vmul.f32 %v973, %v973
          %v1014 = vmul.f32 %v974, %v974
          %v1015 = vadd.f32 %v999, %v1000
          %v1016 = vadd.f32 %v1015, %v1001
          %v1017 = vadd.f32 %v1016, %v1002
          %v1018 = vadd.f32 %v1017, %v1003
          %v1019 = vadd.f32 %v1018, %v1004
          %v1020 = vadd.f32 %v1019, %v1005
          %v1021 = vadd.f32 %v1020, %v1006
          %v1022 = vadd.f32 %v1021, %v1007
          %v1023 = vadd.f32 %v1022, %v1008
          %v1024 = vadd.f32 %v1023, %v1009
          %v1025 = vadd.f32 %v1024, %v1010
          %v1026 = vadd.f32 %v1025, %v1011
          %v1027 = vadd.f32 %v1026, %v1012
          %v1028 = vadd.f32 %v1027, %v1013
          %v1029 = vadd.f32 %v1028, %v1014
          %1030 = vadd.xlane.f32.xlu0 %v1029
          %v1031 = vpop.xlane.xlu0 %1030
          %v1032 = vrot.slane %v1031, 4
          %v1033 = vadd.f32 %v1031, %v1032
          %v1034 = vrot.slane %v1033, 2
          %v1035 = vadd.f32 %v1033, %v1034
          %v1036 = vrot.slane %v1035, 1
          %v1037 = vadd.f32 %v1035, %v1036
          %s1038 = vtos %v1037
          %vm1039 = vcmp.eq.s32.totalorder %v938, 0
          %vm1040 = vcmp.eq.s32.totalorder %v938, 1
          %v1041 = vstv %s1038
          %v1042 = vsel %vm1040, %v1041, 0.0
          %v1043 = vstv %s998
          %v1044 = vsel %vm1039, %v1043, %v1042
          %1045 = vst [vmem:[%s538] sm:$0xff] %v1044
        $region129: #{tpu_custom_call.1} parent=112 // pred_fallthru
          _
        %s1046 = sand.u32 %s130, 1
        %s1047 = sand.u32 %s130, 1
        %s1048 = smul.addr %s1047, 128
        %s1049 = scalar_lea.vmem [#allocation4], %s1048
        %s1050 = sand.u32 %s158, 1
        %s1051 = scalar_lea.sflag [#allocation6], %s1050
        %s1052 = sand.u32 %s158, 1
        %s1053 = smul.addr %s1052, 8
        %s1054 = scalar_lea.vmem [#allocation5], %s1053
        // Predicated region
        $region130: #{tpu_custom_call.1} parent=112 // pred_check
          %p1055 = pneg %p140
        $region131: #{tpu_custom_call.1} parent=112 // pred_check_branch
          %1057 = sbr.rel (%p1055) target = $region133
        $region132: #{tpu_custom_call.1} parent=112 // pred_region
          %s1058 = smul.u32 16, %s24
          %s1059 = ssub.s32 25, %s1058
          %p1060 = scmp.lt.s32.totalorder %s1059, 16
          %s1061 = scalar_select %p1060, %s1059, 16
          %s1062 = smul.u32 8, %s1061
          %p1063 = scmp.ne.s32.totalorder 0, %s1062
          %s1064 = smul.addr %s1058, 2
          %s1065 = sadd.s32 %s25, %s1064
          %s1066 = smul.addr %s1065, 8
          %s1067 = scalar_lea.vmem %s3, %s1066
          // Predicated region
          $region134: #{tpu_custom_call.1} parent=132 // pred_check
            %p1068 = pneg %p1063
          $region135: #{tpu_custom_call.1} parent=132 // pred_check_branch
            %1070 = sbr.rel (%p1068) target = $region137
          $region136: #{tpu_custom_call.1} parent=132 // pred_region
            // Predicated region
            $region138: #{tpu_custom_call.1} parent=136 // pred_check
              _
            $region139: #{tpu_custom_call.1} parent=136 // pred_check_branch
              %1072 = sbr.rel (0) target = $region141
            $region140: #{tpu_custom_call.1} parent=136 // pred_region
              // Predicated region
              $region160: #{tpu_custom_call.1} parent=140 // pred_check
                _
              $region161: #{tpu_custom_call.1} parent=140 // pred_check_branch
                %1152 = sbr.rel (0) target = $region163
              $region162: #{tpu_custom_call.1} parent=140 // pred_region
                %s1153 = sshrl.u32 %s1061, 4
                // While loop
                $region164: #{tpu_custom_call.1} parent=162 // loop_pre_header
                  _
                $region165: #{tpu_custom_call.1} parent=162 // loop_header
                  %s1155 = sphi 0, %s1157
                  %p1156 = scmp.ge.s32.totalorder %s1155, %s1153
                  %s1160 = sphi 0, %s1197
                  %s1161 = sphi %s1049, %s1200
                  %s1162 = sphi %s1067, %s1201
                $region166: #{tpu_custom_call.1} parent=162 // loop_header_branch
                  %1159 = sbr.rel (%p1156) target = $region170
                $region167: #{tpu_custom_call.1} parent=162 // loop_body
                  %v1163 = vld [vmem:[%s1161] sm:$0xff]
                  %1164 = vst [vmem:[%s1162] sm:$0xff] %v1163
                  %v1165 = vld [vmem:[%s1161 + $0x8] sm:$0xff]
                  %1166 = vst [vmem:[%s1162 + $0x10] sm:$0xff] %v1165
                  %v1167 = vld [vmem:[%s1161 + $0x10] sm:$0xff]
                  %1168 = vst [vmem:[%s1162 + $0x20] sm:$0xff] %v1167
                  %v1169 = vld [vmem:[%s1161 + $0x18] sm:$0xff]
                  %1170 = vst [vmem:[%s1162 + $0x30] sm:$0xff] %v1169
                  %v1171 = vld [vmem:[%s1161 + $0x20] sm:$0xff]
                  %1172 = vst [vmem:[%s1162 + $0x40] sm:$0xff] %v1171
                  %v1173 = vld [vmem:[%s1161 + $0x28] sm:$0xff]
                  %1174 = vst [vmem:[%s1162 + $0x50] sm:$0xff] %v1173
                  %v1175 = vld [vmem:[%s1161 + $0x30] sm:$0xff]
                  %1176 = vst [vmem:[%s1162 + $0x60] sm:$0xff] %v1175
                  %v1177 = vld [vmem:[%s1161 + $0x38] sm:$0xff]
                  %1178 = vst [vmem:[%s1162 + $0x70] sm:$0xff] %v1177
                  %v1179 = vld [vmem:[%s1161 + $0x40] sm:$0xff]
                  %1180 = vst [vmem:[%s1162 + $0x80] sm:$0xff] %v1179
                  %v1181 = vld [vmem:[%s1161 + $0x48] sm:$0xff]
                  %1182 = vst [vmem:[%s1162 + $0x90] sm:$0xff] %v1181
                  %v1183 = vld [vmem:[%s1161 + $0x50] sm:$0xff]
                  %1184 = vst [vmem:[%s1162 + $0xa0] sm:$0xff] %v1183
                  %v1185 = vld [vmem:[%s1161 + $0x58] sm:$0xff]
                  %1186 = vst [vmem:[%s1162 + $0xb0] sm:$0xff] %v1185
                  %v1187 = vld [vmem:[%s1161 + $0x60] sm:$0xff]
                  %1188 = vst [vmem:[%s1162 + $0xc0] sm:$0xff] %v1187
                  %v1189 = vld [vmem:[%s1161 + $0x68] sm:$0xff]
                  %1190 = vst [vmem:[%s1162 + $0xd0] sm:$0xff] %v1189
                  %v1191 = vld [vmem:[%s1161 + $0x70] sm:$0xff]
                  %1192 = vst [vmem:[%s1162 + $0xe0] sm:$0xff] %v1191
                  %v1193 = vld [vmem:[%s1161 + $0x78] sm:$0xff]
                  %1194 = vst [vmem:[%s1162 + $0xf0] sm:$0xff] %v1193
                  %s1195 = sadd.s32 1, %s1160
                  %p1196 = scmp.ge.s32.totalorder %s1195, %s1153
                  %s1197 = scalar_select %p1196, 0, %s1195
                  %s1198 = smul.u32 %s1197, 128
                  %s1199 = smul.u32 %s1197, 256
                  %s1200 = scalar_lea.vmem %s1049, %s1198 [#allocation4]
                  %s1201 = scalar_lea.vmem %s1067, %s1199
                $region168: #{tpu_custom_call.1} parent=162 // loop_footer
                  %s1157 = sadd.s32 %s1155, 1
                $region169: #{tpu_custom_call.1} parent=162 // loop_footer_branch
                  %1154 = sbr.rel target = $region165
                $region170: #{tpu_custom_call.1} parent=162 // loop_exit
                  _
                %s1202 = sshrl.u32 %s1061, 4
                %s1203 = sand.u32 %s1061, 15
                %s1204 = smul.u32 %s1202, 16
                %s1205 = smul.u32 8, %s1204
                %s1206 = scalar_lea.vmem %s1049, %s1205 [#allocation4]
                %s1207 = smul.u32 16, %s1204
                %s1208 = scalar_lea.vmem %s1067, %s1207
                // While loop
                $region171: #{tpu_custom_call.1} parent=162 // loop_pre_header
                  _
                $region172: #{tpu_custom_call.1} parent=162 // loop_header
                  %s1210 = sphi 0, %s1212
                  %p1211 = scmp.ge.s32.totalorder %s1210, %s1203
                  %s1215 = sphi 0, %s1222
                  %s1216 = sphi %s1206, %s1225
                  %s1217 = sphi %s1208, %s1226
                $region173: #{tpu_custom_call.1} parent=162 // loop_header_branch
                  %1214 = sbr.rel (%p1211) target = $region177
                $region174: #{tpu_custom_call.1} parent=162 // loop_body
                  %v1218 = vld [vmem:[%s1216] sm:$0xff]
                  %1219 = vst [vmem:[%s1217] sm:$0xff] %v1218
                  %s1220 = sadd.s32 1, %s1215
                  %p1221 = scmp.ge.s32.totalorder %s1220, %s1203
                  %s1222 = scalar_select %p1221, 0, %s1220
                  %s1223 = smul.u32 %s1222, 8
                  %s1224 = smul.u32 %s1222, 16
                  %s1225 = scalar_lea.vmem %s1206, %s1223 [#allocation4]
                  %s1226 = scalar_lea.vmem %s1208, %s1224
                $region175: #{tpu_custom_call.1} parent=162 // loop_footer
                  %s1212 = sadd.s32 %s1210, 1
                $region176: #{tpu_custom_call.1} parent=162 // loop_footer_branch
                  %1209 = sbr.rel target = $region172
                $region177: #{tpu_custom_call.1} parent=162 // loop_exit
                  _
              $region163: #{tpu_custom_call.1} parent=140 // pred_fallthru
                _
              // Predicated region
              $region178: #{tpu_custom_call.1} parent=140 // pred_check
                _
              $region179: #{tpu_custom_call.1} parent=140 // pred_check_branch
                %1228 = sbr.rel target = $region181
              $region180: #{tpu_custom_call.1} parent=140 // pred_region
                _
              $region181: #{tpu_custom_call.1} parent=140 // pred_fallthru
                _
            $region141: #{tpu_custom_call.1} parent=136 // pred_fallthru
              _
            // Predicated region
            $region142: #{tpu_custom_call.1} parent=136 // pred_check
              _
            $region143: #{tpu_custom_call.1} parent=136 // pred_check_branch
              %1074 = sbr.rel target = $region145
            $region144: #{tpu_custom_call.1} parent=136 // pred_region
              %s1076 = ssub.s32 256, 1
              %s1077 = sshrl.u32 %s1061, 4
              // While loop
              $region146: #{tpu_custom_call.1} parent=144 // loop_pre_header
                _
              $region147: #{tpu_custom_call.1} parent=144 // loop_header
                %s1079 = sphi 0, %s1081
                %p1080 = scmp.ge.s32.totalorder %s1079, %s1077
                %s1084 = sphi 0, %s1121
                %s1085 = sphi %s1049, %s1124
                %s1086 = sphi %s1067, %s1125
              $region148: #{tpu_custom_call.1} parent=144 // loop_header_branch
                %1083 = sbr.rel (%p1080) target = $region152
              $region149: #{tpu_custom_call.1} parent=144 // loop_body
                %v1087 = vld [vmem:[%s1085] sm:%s1076]
                %1088 = vst [vmem:[%s1086] sm:%s1076] %v1087
                %v1089 = vld [vmem:[%s1085 + $0x8] sm:%s1076]
                %1090 = vst [vmem:[%s1086 + $0x10] sm:%s1076] %v1089
                %v1091 = vld [vmem:[%s1085 + $0x10] sm:%s1076]
                %1092 = vst [vmem:[%s1086 + $0x20] sm:%s1076] %v1091
                %v1093 = vld [vmem:[%s1085 + $0x18] sm:%s1076]
                %1094 = vst [vmem:[%s1086 + $0x30] sm:%s1076] %v1093
                %v1095 = vld [vmem:[%s1085 + $0x20] sm:%s1076]
                %1096 = vst [vmem:[%s1086 + $0x40] sm:%s1076] %v1095
                %v1097 = vld [vmem:[%s1085 + $0x28] sm:%s1076]
                %1098 = vst [vmem:[%s1086 + $0x50] sm:%s1076] %v1097
                %v1099 = vld [vmem:[%s1085 + $0x30] sm:%s1076]
                %1100 = vst [vmem:[%s1086 + $0x60] sm:%s1076] %v1099
                %v1101 = vld [vmem:[%s1085 + $0x38] sm:%s1076]
                %1102 = vst [vmem:[%s1086 + $0x70] sm:%s1076] %v1101
                %v1103 = vld [vmem:[%s1085 + $0x40] sm:%s1076]
                %1104 = vst [vmem:[%s1086 + $0x80] sm:%s1076] %v1103
                %v1105 = vld [vmem:[%s1085 + $0x48] sm:%s1076]
                %1106 = vst [vmem:[%s1086 + $0x90] sm:%s1076] %v1105
                %v1107 = vld [vmem:[%s1085 + $0x50] sm:%s1076]
                %1108 = vst [vmem:[%s1086 + $0xa0] sm:%s1076] %v1107
                %v1109 = vld [vmem:[%s1085 + $0x58] sm:%s1076]
                %1110 = vst [vmem:[%s1086 + $0xb0] sm:%s1076] %v1109
                %v1111 = vld [vmem:[%s1085 + $0x60] sm:%s1076]
                %1112 = vst [vmem:[%s1086 + $0xc0] sm:%s1076] %v1111
                %v1113 = vld [vmem:[%s1085 + $0x68] sm:%s1076]
                %1114 = vst [vmem:[%s1086 + $0xd0] sm:%s1076] %v1113
                %v1115 = vld [vmem:[%s1085 + $0x70] sm:%s1076]
                %1116 = vst [vmem:[%s1086 + $0xe0] sm:%s1076] %v1115
                %v1117 = vld [vmem:[%s1085 + $0x78] sm:%s1076]
                %1118 = vst [vmem:[%s1086 + $0xf0] sm:%s1076] %v1117
                %s1119 = sadd.s32 1, %s1084
                %p1120 = scmp.ge.s32.totalorder %s1119, %s1077
                %s1121 = scalar_select %p1120, 0, %s1119
                %s1122 = smul.u32 %s1121, 128
                %s1123 = smul.u32 %s1121, 256
                %s1124 = scalar_lea.vmem %s1049, %s1122 [#allocation4]
                %s1125 = scalar_lea.vmem %s1067, %s1123
              $region150: #{tpu_custom_call.1} parent=144 // loop_footer
                %s1081 = sadd.s32 %s1079, 1
              $region151: #{tpu_custom_call.1} parent=144 // loop_footer_branch
                %1078 = sbr.rel target = $region147
              $region152: #{tpu_custom_call.1} parent=144 // loop_exit
                _
              %s1126 = sshrl.u32 %s1061, 4
              %s1127 = sand.u32 %s1061, 15
              %s1128 = smul.u32 %s1126, 16
              %s1129 = smul.u32 8, %s1128
              %s1130 = scalar_lea.vmem %s1049, %s1129 [#allocation4]
              %s1131 = smul.u32 16, %s1128
              %s1132 = scalar_lea.vmem %s1067, %s1131
              // While loop
              $region153: #{tpu_custom_call.1} parent=144 // loop_pre_header
                _
              $region154: #{tpu_custom_call.1} parent=144 // loop_header
                %s1134 = sphi 0, %s1136
                %p1135 = scmp.ge.s32.totalorder %s1134, %s1127
                %s1139 = sphi 0, %s1146
                %s1140 = sphi %s1130, %s1149
                %s1141 = sphi %s1132, %s1150
              $region155: #{tpu_custom_call.1} parent=144 // loop_header_branch
                %1138 = sbr.rel (%p1135) target = $region159
              $region156: #{tpu_custom_call.1} parent=144 // loop_body
                %v1142 = vld [vmem:[%s1140] sm:%s1076]
                %1143 = vst [vmem:[%s1141] sm:%s1076] %v1142
                %s1144 = sadd.s32 1, %s1139
                %p1145 = scmp.ge.s32.totalorder %s1144, %s1127
                %s1146 = scalar_select %p1145, 0, %s1144
                %s1147 = smul.u32 %s1146, 8
                %s1148 = smul.u32 %s1146, 16
                %s1149 = scalar_lea.vmem %s1130, %s1147 [#allocation4]
                %s1150 = scalar_lea.vmem %s1132, %s1148
              $region157: #{tpu_custom_call.1} parent=144 // loop_footer
                %s1136 = sadd.s32 %s1134, 1
              $region158: #{tpu_custom_call.1} parent=144 // loop_footer_branch
                %1133 = sbr.rel target = $region154
              $region159: #{tpu_custom_call.1} parent=144 // loop_exit
                _
            $region145: #{tpu_custom_call.1} parent=136 // pred_fallthru
              _
          $region137: #{tpu_custom_call.1} parent=132 // pred_fallthru
            _
          %1229 = vnop
        $region133: #{tpu_custom_call.1} parent=112 // pred_fallthru
          _
        // Predicated region
        $region182: #{tpu_custom_call.1} parent=112 // pred_check
          %p1230 = pneg %p168
        $region183: #{tpu_custom_call.1} parent=112 // pred_check_branch
          %1232 = sbr.rel (%p1230) target = $region185
        $region184: #{tpu_custom_call.1} parent=112 // pred_region
          %1234 = vsyncadd %s1051, 0
          %s1235 = smul.addr %s24, 2
          %s1236 = sadd.s32 %s25, %s1235
          %s1237 = smul.addr %s1236, 8
          %s1238 = scalar_lea.hbm %s4, %s1237
          %s1240 = sshll.u32 %s1054, 4
          %s1241 = int_to_ptr.vmem [resolvable:$true] %s1240
          %s1242 = sshll.u32 %s1238, 4
          %s1243 = int_to_ptr.hbm [resolvable:$true] %s1242
          %1245 = dma.vmem_to_hbm [thread:$0]  %s1241, 128, %s1243, %s1051
        $region185: #{tpu_custom_call.1} parent=112 // pred_fallthru
          _
      $region113: #{tpu_custom_call.1} parent=5 // pred_fallthru
        _
      %p1246 = scmp.le.s32.totalorder 2, %s14
      // Predicated region
      $region186: #{tpu_custom_call.1} parent=5 // pred_check
        %p1247 = pneg %p1246
      $region187: #{tpu_custom_call.1} parent=5 // pred_check_branch
        %1249 = sbr.rel (%p1247) target = $region189
      $region188: #{tpu_custom_call.1} parent=5 // pred_region
        %s1250 = ssub.s32 %s14, 2
        // Predicated region
        $region190: #{tpu_custom_call.1} parent=188 // pred_check
          %p1251 = pneg %p146
        $region191: #{tpu_custom_call.1} parent=188 // pred_check_branch
          %1253 = sbr.rel (%p1251) target = $region193
        $region192: #{tpu_custom_call.1} parent=188 // pred_region
          %s1254 = sand.u32 %s131, 1
          %s1255 = sand.u32 %s131, 1
          %s1256 = smul.addr %s1255, 128
          %s1257 = scalar_lea.vmem [#allocation4], %s1256
        $region193: #{tpu_custom_call.1} parent=188 // pred_fallthru
          _
        // Predicated region
        $region194: #{tpu_custom_call.1} parent=188 // pred_check
          %p1258 = pneg %p174
        $region195: #{tpu_custom_call.1} parent=188 // pred_check_branch
          %1260 = sbr.rel (%p1258) target = $region197
        $region196: #{tpu_custom_call.1} parent=188 // pred_region
          %s1261 = sand.u32 %s159, 1
          %s1262 = scalar_lea.sflag [#allocation6], %s1261
          %s1263 = sand.u32 %s159, 1
          %s1264 = smul.addr %s1263, 8
          %s1265 = scalar_lea.vmem [#allocation5], %s1264
          %1267 = dma.done %s1262, 128
        $region197: #{tpu_custom_call.1} parent=188 // pred_fallthru
          _
      $region189: #{tpu_custom_call.1} parent=5 // pred_fallthru
        _
    $region6: #{tpu_custom_call.1} parent=1 // loop_footer
      %s18 = sadd.s32 1, %s14
    $region7: #{tpu_custom_call.1} parent=1 // loop_footer_branch
      %13 = sbr.rel target = $region3
    $region8: #{tpu_custom_call.1} parent=1 // loop_exit
      _
    %1268 = vsyncpa [#allocation6], 1
    %s1269 = scalar_lea.sflag [#allocation6], 1
    %1270 = vsyncpa %s1269, 1

</llo_original>
